<compile_context>
chip_gen: v5e
topology: v5e:2x2
jax: 0.10.0
libtpu: 0.0.40
codegen_flags: <defaults>
</compile_context>

<pallas_src>
import math

import jax
import jax.numpy as jnp
from jax.experimental import pallas as pl
from jax.experimental.pallas import tpu as pltpu


# ----------------------------------------------------------------------------
# In-kernel helpers (operate on VMEM-resident values)
# ----------------------------------------------------------------------------
def _mm(a, w):
    """MXU matmul: activation cast to bf16, weight already bf16, f32 accum."""
    return jnp.dot(a.astype(jnp.bfloat16), w, preferred_element_type=jnp.float32)


def _ln(x, g, b):
    mu = jnp.mean(x, axis=-1, keepdims=True)
    xc = x - mu
    var = jnp.mean(xc * xc, axis=-1, keepdims=True)
    return xc * jax.lax.rsqrt(var + 1e-5) * g + b


def _block(x2, B, S, D, heads, mask,
           ln1_g, ln1_b, wqkv, bqkv, wout, bout,
           ln2_g, ln2_b, wfc, bfc, wproj, bproj):
    """One residual block on a flattened (B*S, D) activation (stays in VMEM)."""
    dh = D // heads
    scale = 1.0 / math.sqrt(dh)

    # ---- multi-head self-attention -----------------------------------------
    h = _ln(x2, ln1_g, ln1_b)
    qkv = _mm(h, wqkv) + bqkv                                  # (B*S, 3D) f32

    heads_out = []
    for hh in range(heads):                                    # static, small
        o = hh * dh
        qh = qkv[:, o:o + dh].reshape(B, S, dh).astype(jnp.bfloat16)
        kh = qkv[:, D + o:D + o + dh].reshape(B, S, dh).astype(jnp.bfloat16)
        vh = qkv[:, 2 * D + o:2 * D + o + dh].reshape(B, S, dh).astype(jnp.bfloat16)
        s = jnp.einsum('bqd,bkd->bqk', qh, kh,
                       preferred_element_type=jnp.float32) * scale
        if mask is not None:
            s = s + mask                                       # (S,S) broadcast
        s = s - jnp.max(s, axis=-1, keepdims=True)
        p = jnp.exp(s)
        p = p * pl.reciprocal(jnp.sum(p, axis=-1, keepdims=True), approx=True)
        heads_out.append(
            jnp.einsum('bqk,bkd->bqd', p.astype(jnp.bfloat16), vh,
                       preferred_element_type=jnp.float32))    # (B, S, dh)

    # fuse all heads into ONE K=D output projection
    attn = jnp.concatenate(heads_out, axis=-1).reshape(B * S, D)
    x2 = x2 + _mm(attn, wout) + bout

    # ---- MLP (QuickGELU) -----------------------------------------------------
    h2 = _ln(x2, ln2_g, ln2_b)
    hfc = _mm(h2, wfc) + bfc
    hfc = hfc * jax.nn.sigmoid(1.702 * hfc)
    return x2 + _mm(hfc, wproj) + bproj


# ----------------------------------------------------------------------------
# Spec helpers
# ----------------------------------------------------------------------------
def _const_spec(a):
    """Whole-array block, resident across both grid axes."""
    zero = (0,) * a.ndim
    return pl.BlockSpec(a.shape, lambda b, l: zero)


def _layer_spec(a):
    """Stream one layer's slice of a stacked (L, ...) parameter per grid step."""
    nz = a.ndim - 1
    return pl.BlockSpec((1,) + a.shape[1:], lambda b, l: (l,) + (0,) * nz)


def _stack_blocks(blocks):
    """Stack per-layer params along a layer axis; weights bf16, rest f32."""
    def stk(name, dtype):
        a = jnp.stack([blk[name] for blk in blocks], axis=0)
        if a.ndim == 2:
            a = a[:, None, :]          # vectors -> (L, 1, D)
        return a.astype(dtype)
    return (
        stk("ln1_g", jnp.float32), stk("ln1_b", jnp.float32),
        stk("w_qkv", jnp.bfloat16), stk("b_qkv", jnp.float32),
        stk("w_out", jnp.bfloat16), stk("b_out", jnp.float32),
        stk("ln2_g", jnp.float32), stk("ln2_b", jnp.float32),
        stk("w_fc", jnp.bfloat16), stk("b_fc", jnp.float32),
        stk("w_proj", jnp.bfloat16), stk("b_proj", jnp.float32),
    )


def _pick_tile(n, max_tile=8):
    """Largest divisor of n that is <= max_tile.

    max_tile is the generation-specific knob (v7x: ~half the VMEM of v5e/v6e,
    so use a smaller value there for real CLIP shapes)."""
    for t in range(min(n, max_tile), 0, -1):
        if n % t == 0:
            return t
    return 1


_VMEM_LIMIT = 64 * 1024 * 1024   # explicit scoped-VMEM budget (re-derive per gen)


# ----------------------------------------------------------------------------
# Fused visual encoder: grid = (image_tiles, layers), activation in VMEM scratch
# ----------------------------------------------------------------------------
def encode_image(image, vis, pixel_mean, pixel_std):
    N, C, H, W = image.shape
    P = vis["patch"]
    gh, gw = H // P, W // P
    n_patch = gh * gw
    Kp = C * P * P
    S = n_patch + 1
    Dv = vis["conv_w"].shape[1]
    E = vis["proj"].shape[1]
    heads = vis["heads"]
    L = len(vis["blocks"])
    B_TILE = _pick_tile(N)

    # unfold into (N, S, Kp) tokens; row 0 is a zero slot for the CLS token so
    # the whole (CLS + patches) embedding is a single matmul inside the kernel.
    patches = (image.reshape(N, C, gh, P, gw, P)
                    .transpose(0, 2, 4, 1, 3, 5)
                    .reshape(N, n_patch, Kp))
    patches = jnp.concatenate(
        [jnp.zeros((N, 1, Kp), jnp.float32), patches], axis=1)        # (N, S, Kp)

    # fold pixel normalization into the patch-embedding weights / bias (bf16)
    mean_vec = jnp.repeat(pixel_mean, P * P)                          # (Kp,)
    istd_vec = 1.0 / jnp.repeat(pixel_std, P * P)                     # (Kp,)
    conv_w_eff = (vis["conv_w"] * istd_vec[:, None]).astype(jnp.bfloat16)
    conv_bias = -jnp.dot(mean_vec * istd_vec, vis["conv_w"])          # (Dv,)
    token_bias = vis["pos_emb"] + jnp.concatenate(
        [vis["class_emb"][None, :], jnp.tile(conv_bias[None, :], (n_patch, 1))],
        axis=0)                                                       # (S, Dv)

    blk = _stack_blocks(vis["blocks"])
    lnpre_g = vis["ln_pre_g"].reshape(1, Dv)
    lnpre_b = vis["ln_pre_b"].reshape(1, Dv)
    lnpost_g = vis["ln_post_g"].reshape(1, Dv)
    lnpost_b = vis["ln_post_b"].reshape(1, Dv)
    proj_bf16 = vis["proj"].astype(jnp.bfloat16)

    inputs = (patches, conv_w_eff, token_bias, lnpre_g, lnpre_b) + blk + (
        lnpost_g, lnpost_b, proj_bf16)

    def kernel(patches_ref, conv_w_ref, tokbias_ref, lnpre_g_ref, lnpre_b_ref,
               ln1_g, ln1_b, wqkv, bqkv, wout, bout,
               ln2_g, ln2_b, wfc, bfc, wproj, bproj,
               lnpost_g_ref, lnpost_b_ref, proj_ref, o_ref, x_scr):
        l = pl.program_id(1)

        @pl.when(l == 0)                         # embedding phase
        def _():
            pt = patches_ref[...].reshape(B_TILE * S, Kp)
            x = _mm(pt, conv_w_ref[...]).reshape(B_TILE, S, Dv) + tokbias_ref[...]
            x = _ln(x, lnpre_g_ref[...], lnpre_b_ref[...])
            x_scr[...] = x.reshape(B_TILE * S, Dv)

        # transformer block `l` (weights of this layer only are in VMEM)
        x2 = _block(x_scr[...], B_TILE, S, Dv, heads, None,
                    ln1_g[0], ln1_b[0], wqkv[0], bqkv[0], wout[0], bout[0],
                    ln2_g[0], ln2_b[0], wfc[0], bfc[0], wproj[0], bproj[0])
        x_scr[...] = x2

        @pl.when(l == pl.num_programs(1) - 1)    # final LN + projection (CLS)
        def _():
            cls = x2.reshape(B_TILE, S, Dv)[:, 0, :]
            cls = _ln(cls, lnpost_g_ref[...], lnpost_b_ref[...])
            o_ref[...] = _mm(cls, proj_ref[...])

    in_specs = ([pl.BlockSpec((B_TILE, S, Kp), lambda b, l: (b, 0, 0)),
                 _const_spec(conv_w_eff), _const_spec(token_bias),
                 _const_spec(lnpre_g), _const_spec(lnpre_b)]
                + [_layer_spec(a) for a in blk]
                + [_const_spec(lnpost_g), _const_spec(lnpost_b),
                   _const_spec(proj_bf16)])

    return pl.pallas_call(
        kernel,
        out_shape=jax.ShapeDtypeStruct((N, E), jnp.float32),
        grid=(N // B_TILE, L),
        in_specs=in_specs,
        out_specs=pl.BlockSpec((B_TILE, E), lambda b, l: (b, 0)),
        scratch_shapes=[pltpu.VMEM((B_TILE * S, Dv), jnp.float32)],
        compiler_params=pltpu.CompilerParams(
            dimension_semantics=("parallel", "arbitrary"),
            vmem_limit_bytes=_VMEM_LIMIT),
    )(*inputs)


# ----------------------------------------------------------------------------
# Fused text encoder: prompt learner + layer-streamed transformer + EOT + proj
# ----------------------------------------------------------------------------
def encode_text(txt, tokenized_prompts):
    # PromptLearner (class_token_position == 'end'): [prefix, ctx, suffix]
    ctx = txt["ctx"]
    n_cls = txt["token_prefix"].shape[0]
    ctx_b = jnp.broadcast_to(ctx[None], (n_cls,) + ctx.shape)
    prompts = jnp.concatenate(
        [txt["token_prefix"], ctx_b, txt["token_suffix"]], axis=1)    # (n_cls,S,Dt)
    n_cls, S, Dt = prompts.shape
    E = txt["text_projection"].shape[1]
    heads = txt["heads"]
    L = len(txt["blocks"])
    B_TILE = _pick_tile(n_cls)

    eot_idx = jnp.argmax(tokenized_prompts, axis=-1)                  # (n_cls,)
    eot_sel = jax.nn.one_hot(eot_idx, S, dtype=jnp.float32)[:, :, None]

    # causal mask built once on the host, resident constant in VMEM
    causal = jnp.triu(jnp.full((S, S), -1e9, dtype=jnp.float32), k=1)

    blk = _stack_blocks(txt["blocks"])
    lnf_g = txt["ln_final_g"].reshape(1, Dt)
    lnf_b = txt["ln_final_b"].reshape(1, Dt)
    tproj_bf16 = txt["text_projection"].astype(jnp.bfloat16)

    inputs = (prompts, txt["pos_emb"], eot_sel, causal) + blk + (
        lnf_g, lnf_b, tproj_bf16)

    def kernel(prompts_ref, pos_ref, eot_ref, mask_ref,
               ln1_g, ln1_b, wqkv, bqkv, wout, bout,
               ln2_g, ln2_b, wfc, bfc, wproj, bproj,
               lnf_g_ref, lnf_b_ref, tproj_ref, o_ref, x_scr):
        l = pl.program_id(1)

        @pl.when(l == 0)                         # embedding phase
        def _():
            x = prompts_ref[...] + pos_ref[...]
            x_scr[...] = x.reshape(B_TILE * S, Dt)

        x2 = _block(x_scr[...], B_TILE, S, Dt, heads, mask_ref[...],
                    ln1_g[0], ln1_b[0], wqkv[0], bqkv[0], wout[0], bout[0],
                    ln2_g[0], ln2_b[0], wfc[0], bfc[0], wproj[0], bproj[0])
        x_scr[...] = x2

        @pl.when(l == pl.num_programs(1) - 1)    # EOT gather + LN + projection
        def _():
            feat = jnp.sum(x2.reshape(B_TILE, S, Dt) * eot_ref[...], axis=1)
            feat = _ln(feat, lnf_g_ref[...], lnf_b_ref[...])
            o_ref[...] = _mm(feat, tproj_ref[...])

    in_specs = ([pl.BlockSpec((B_TILE, S, Dt), lambda b, l: (b, 0, 0)),
                 _const_spec(txt["pos_emb"]),
                 pl.BlockSpec((B_TILE, S, 1), lambda b, l: (b, 0, 0)),
                 _const_spec(causal)]
                + [_layer_spec(a) for a in blk]
                + [_const_spec(lnf_g), _const_spec(lnf_b),
                   _const_spec(tproj_bf16)])

    return pl.pallas_call(
        kernel,
        out_shape=jax.ShapeDtypeStruct((n_cls, E), jnp.float32),
        grid=(n_cls // B_TILE, L),
        in_specs=in_specs,
        out_specs=pl.BlockSpec((B_TILE, E), lambda b, l: (b, 0)),
        scratch_shapes=[pltpu.VMEM((B_TILE * S, Dt), jnp.float32)],
        compiler_params=pltpu.CompilerParams(
            dimension_semantics=("parallel", "arbitrary"),
            vmem_limit_bytes=_VMEM_LIMIT),
    )(*inputs)


# ----------------------------------------------------------------------------
# Final logits kernel: L2 normalize both sides + logit_scale * img @ txt^T
# ----------------------------------------------------------------------------
def _logits_kernel(img_ref, txt_ref, s_ref, o_ref):
    img = img_ref[...]
    txt = txt_ref[...]
    img = img * jax.lax.rsqrt(jnp.sum(img * img, axis=-1, keepdims=True) + 1e-12)
    txt = txt * jax.lax.rsqrt(jnp.sum(txt * txt, axis=-1, keepdims=True) + 1e-12)
    o_ref[...] = jnp.exp(s_ref[0, 0]) * jax.lax.dot_general(
        img, txt, dimension_numbers=(((1,), (1,)), ((), ())),
        preferred_element_type=jnp.float32)


def clip_logits(img_feat, txt_feat, logit_scale):
    B = img_feat.shape[0]
    C = txt_feat.shape[0]
    return pl.pallas_call(
        _logits_kernel,
        out_shape=jax.ShapeDtypeStruct((B, C), jnp.float32),
    )(img_feat, txt_feat, logit_scale.reshape(1, 1))


# ----------------------------------------------------------------------------
# CustomCLIP forward
# ----------------------------------------------------------------------------
def custom_clip_forward(image, params, backdoor_tags=None):
    # TODO(synk): PatchTrigger / NoiseTrigger implementations were not provided
    # in the reference source; treated as identity (no trigger applied).
    del backdoor_tags
    img = image.astype(jnp.float32)
    image_features = encode_image(img, params["visual"],
                                  params["pixel_mean"], params["pixel_std"])
    text_features = encode_text(params["text"], params["tokenized_prompts"])
    return clip_logits(image_features, text_features, params["logit_scale"])


# ----------------------------------------------------------------------------
# Deterministic parameter initialization (synthetic, no checkpoint loading)
# ----------------------------------------------------------------------------
def _init_block(key, D):
    ks = jax.random.split(key, 4)
    return {
        "ln1_g": jnp.ones((D,), jnp.float32),
        "ln1_b": jnp.zeros((D,), jnp.float32),
        "w_qkv": 0.02 * jax.random.normal(ks[0], (D, 3 * D), jnp.float32),
        "b_qkv": jnp.zeros((3 * D,), jnp.float32),
        "w_out": 0.02 * jax.random.normal(ks[1], (D, D), jnp.float32),
        "b_out": jnp.zeros((D,), jnp.float32),
        "ln2_g": jnp.ones((D,), jnp.float32),
        "ln2_b": jnp.zeros((D,), jnp.float32),
        "w_fc": 0.02 * jax.random.normal(ks[2], (D, 4 * D), jnp.float32),
        "b_fc": jnp.zeros((4 * D,), jnp.float32),
        "w_proj": 0.02 * jax.random.normal(ks[3], (4 * D, D), jnp.float32),
        "b_proj": jnp.zeros((D,), jnp.float32),
    }


def init_params(key):
    # Small synthetic CLIP: 16x16 image, 8x8 patches, width 32, 2 heads,
    # 2 layers per encoder (exercises the layer-streaming grid axis).
    C, P, Dv, Dt, E = 3, 8, 32, 32, 16
    n_cls, n_ctx, seq = 4, 4, 8
    n_layers = 2
    n_vis_tokens = (16 // P) * (16 // P) + 1  # 4 patches + cls = 5

    keys = jax.random.split(key, 12)
    vis_blk_keys = jax.random.split(keys[3], n_layers)
    txt_blk_keys = jax.random.split(keys[9], n_layers)

    visual = {
        "patch": P,
        "heads": 2,
        "conv_w": 0.02 * jax.random.normal(keys[0], (C * P * P, Dv), jnp.float32),
        "class_emb": 0.02 * jax.random.normal(keys[1], (Dv,), jnp.float32),
        "pos_emb": 0.02 * jax.random.normal(keys[2], (n_vis_tokens, Dv), jnp.float32),
        "ln_pre_g": jnp.ones((Dv,), jnp.float32),
        "ln_pre_b": jnp.zeros((Dv,), jnp.float32),
        "blocks": [_init_block(k, Dv) for k in vis_blk_keys],
        "ln_post_g": jnp.ones((Dv,), jnp.float32),
        "ln_post_b": jnp.zeros((Dv,), jnp.float32),
        "proj": 0.02 * jax.random.normal(keys[4], (Dv, E), jnp.float32),
    }

    text = {
        "heads": 2,
        "ctx": 0.02 * jax.random.normal(keys[5], (n_ctx, Dt), jnp.float32),
        "token_prefix": 0.02 * jax.random.normal(keys[6], (n_cls, 1, Dt), jnp.float32),
        "token_suffix": 0.02
        * jax.random.normal(keys[7], (n_cls, seq - 1 - n_ctx, Dt), jnp.float32),
        "pos_emb": 0.02 * jax.random.normal(keys[8], (seq, Dt), jnp.float32),
        "blocks": [_init_block(k, Dt) for k in txt_blk_keys],
        "ln_final_g": jnp.ones((Dt,), jnp.float32),
        "ln_final_b": jnp.zeros((Dt,), jnp.float32),
        "text_projection": 0.02 * jax.random.normal(keys[10], (Dt, E), jnp.float32),
    }

    # tokenized prompts: [SOT, ctx*4, name_token, EOT, pad]; argmax -> EOT at col 6
    name_toks = jax.random.randint(keys[11], (n_cls, 1), 1, 1000)
    tokenized = jnp.concatenate(
        [
            jnp.full((n_cls, 1), 49406, jnp.int32),
            jnp.tile(jnp.arange(1, n_ctx + 1, dtype=jnp.int32)[None, :], (n_cls, 1)),
            name_toks.astype(jnp.int32),
            jnp.full((n_cls, 1), 49407, jnp.int32),
            jnp.zeros((n_cls, 1), jnp.int32),
        ],
        axis=1,
    )

    return {
        "visual": visual,
        "text": text,
        "tokenized_prompts": tokenized,
        "logit_scale": jnp.array(math.log(1.0 / 0.07), jnp.float32),
        "pixel_mean": jnp.array([0.48145466, 0.4578275, 0.40821073], jnp.float32),
        "pixel_std": jnp.array([0.26862954, 0.26130258, 0.27577711], jnp.float32),
    }


# ----------------------------------------------------------------------------
if __name__ == "__main__":
    key = jax.random.PRNGKey(0)
    k_img, k_param = jax.random.split(key)
    params = init_params(k_param)
    image = jax.random.uniform(k_img, (2, 3, 16, 16), jnp.float32)  # NCHW in [0,1)

    logits = custom_clip_forward(image, params, backdoor_tags=None)
    jax.block_until_ready(logits)
    assert logits.shape == (2, 4) and logits.dtype == jnp.float32
    assert bool(jnp.all(jnp.isfinite(logits)))
    print("KERNEL_OK")
</pallas_src>

<mosaic_0001>
module attributes {stable_mosaic.version = 11 : i64} {
  func.func @kernel(%arg0: i32, %arg1: i32, %arg2: memref<2x5x192xf32, #tpu.memory_space<vmem>>, %arg3: memref<192x32xbf16, #tpu.memory_space<vmem>>, %arg4: memref<5x32xf32, #tpu.memory_space<vmem>>, %arg5: memref<1x32xf32, #tpu.memory_space<vmem>>, %arg6: memref<1x32xf32, #tpu.memory_space<vmem>>, %arg7: memref<1x1x32xf32, #tpu.memory_space<vmem>>, %arg8: memref<1x1x32xf32, #tpu.memory_space<vmem>>, %arg9: memref<1x32x96xbf16, #tpu.memory_space<vmem>>, %arg10: memref<1x1x96xf32, #tpu.memory_space<vmem>>, %arg11: memref<1x32x32xbf16, #tpu.memory_space<vmem>>, %arg12: memref<1x1x32xf32, #tpu.memory_space<vmem>>, %arg13: memref<1x1x32xf32, #tpu.memory_space<vmem>>, %arg14: memref<1x1x32xf32, #tpu.memory_space<vmem>>, %arg15: memref<1x32x128xbf16, #tpu.memory_space<vmem>>, %arg16: memref<1x1x128xf32, #tpu.memory_space<vmem>>, %arg17: memref<1x128x32xbf16, #tpu.memory_space<vmem>>, %arg18: memref<1x1x32xf32, #tpu.memory_space<vmem>>, %arg19: memref<1x32xf32, #tpu.memory_space<vmem>>, %arg20: memref<1x32xf32, #tpu.memory_space<vmem>>, %arg21: memref<32x16xbf16, #tpu.memory_space<vmem>>, %arg22: memref<2x16xf32, #tpu.memory_space<vmem>>, %arg23: memref<10x32xf32, #tpu.memory_space<vmem>>) attributes {dimension_semantics = [#tpu.dimension_semantics<parallel>, #tpu.dimension_semantics<arbitrary>], iteration_bounds = array<i64: 1, 2>, scalar_prefetch = 0 : i64, scratch_operands = 1 : i64, tpu.core_type = #tpu.core_type<tc>, window_params = [{transform_indices = @transform_0, window_bounds = array<i64: 2, 5, 192>}, {pipeline_mode = #tpu.pipeline_mode<synchronous>, transform_indices = @transform_1, window_bounds = array<i64: 192, 32>}, {pipeline_mode = #tpu.pipeline_mode<synchronous>, transform_indices = @transform_2, window_bounds = array<i64: 5, 32>}, {pipeline_mode = #tpu.pipeline_mode<synchronous>, transform_indices = @transform_3, window_bounds = array<i64: 1, 32>}, {pipeline_mode = #tpu.pipeline_mode<synchronous>, transform_indices = @transform_4, window_bounds = array<i64: 1, 32>}, {transform_indices = @transform_5, window_bounds = array<i64: 1, 1, 32>}, {transform_indices = @transform_6, window_bounds = array<i64: 1, 1, 32>}, {transform_indices = @transform_7, window_bounds = array<i64: 1, 32, 96>}, {transform_indices = @transform_8, window_bounds = array<i64: 1, 1, 96>}, {transform_indices = @transform_9, window_bounds = array<i64: 1, 32, 32>}, {transform_indices = @transform_10, window_bounds = array<i64: 1, 1, 32>}, {transform_indices = @transform_11, window_bounds = array<i64: 1, 1, 32>}, {transform_indices = @transform_12, window_bounds = array<i64: 1, 1, 32>}, {transform_indices = @transform_13, window_bounds = array<i64: 1, 32, 128>}, {transform_indices = @transform_14, window_bounds = array<i64: 1, 1, 128>}, {transform_indices = @transform_15, window_bounds = array<i64: 1, 128, 32>}, {transform_indices = @transform_16, window_bounds = array<i64: 1, 1, 32>}, {pipeline_mode = #tpu.pipeline_mode<synchronous>, transform_indices = @transform_17, window_bounds = array<i64: 1, 32>}, {pipeline_mode = #tpu.pipeline_mode<synchronous>, transform_indices = @transform_18, window_bounds = array<i64: 1, 32>}, {pipeline_mode = #tpu.pipeline_mode<synchronous>, transform_indices = @transform_19, window_bounds = array<i64: 32, 16>}, {transform_indices = @transform_20, window_bounds = array<i64: 2, 16>}]} {
    %c0_i32 = arith.constant 0 : i32
    %0 = arith.cmpi eq, %arg1, %c0_i32 : i32
    %1 = arith.extui %0 : i1 to i32
    %c0_i32_0 = arith.constant 0 : i32
    %2 = arith.cmpi ne, %1, %c0_i32_0 : i32
    scf.if %2 {
      %c0_66 = arith.constant 0 : index
      %c0_67 = arith.constant 0 : index
      %c0_68 = arith.constant 0 : index
      %148 = vector.load %arg2[%c0_66, %c0_67, %c0_68] : memref<2x5x192xf32, #tpu.memory_space<vmem>>, vector<2x5x192xf32>
      %149 = vector.shape_cast %148 : vector<2x5x192xf32> to vector<10x192xf32>
      %c0_69 = arith.constant 0 : index
      %c0_70 = arith.constant 0 : index
      %150 = vector.load %arg3[%c0_69, %c0_70] : memref<192x32xbf16, #tpu.memory_space<vmem>>, vector<192x32xbf16>
      %151 = arith.truncf %149 : vector<10x192xf32> to vector<10x192xbf16>
      %cst_71 = arith.constant dense<0.000000e+00> : vector<10x32xf32>
      %152 = tpu.matmul %151, %150, %cst_71 {dimension_numbers = #tpu.dot_dimension_numbers<[1], [0], [0], [1], [0, 0, 1, 1], [], []>} : vector<10x192xbf16>, vector<192x32xbf16>, vector<10x32xf32> -> vector<10x32xf32>
      %153 = vector.shape_cast %152 : vector<10x32xf32> to vector<2x5x32xf32>
      %c0_72 = arith.constant 0 : index
      %c0_73 = arith.constant 0 : index
      %154 = vector.load %arg4[%c0_72, %c0_73] : memref<5x32xf32, #tpu.memory_space<vmem>>, vector<5x32xf32>
      %155 = vector.shape_cast %154 : vector<5x32xf32> to vector<1x5x32xf32>
      %156 = vector.broadcast %155 : vector<1x5x32xf32> to vector<2x5x32xf32>
      %157 = arith.addf %153, %156 : vector<2x5x32xf32>
      %c0_74 = arith.constant 0 : index
      %c0_75 = arith.constant 0 : index
      %158 = vector.load %arg5[%c0_74, %c0_75] : memref<1x32xf32, #tpu.memory_space<vmem>>, vector<1x32xf32>
      %c0_76 = arith.constant 0 : index
      %c0_77 = arith.constant 0 : index
      %159 = vector.load %arg6[%c0_76, %c0_77] : memref<1x32xf32, #tpu.memory_space<vmem>>, vector<1x32xf32>
      %cst_78 = arith.constant dense<0.000000e+00> : vector<2x5xf32>
      %160 = vector.multi_reduction <add>, %157, %cst_78 [2] : vector<2x5x32xf32> to vector<2x5xf32>
      %161 = vector.shape_cast %160 : vector<2x5xf32> to vector<2x5x1xf32>
      %cst_79 = arith.constant 3.200000e+01 : f32
      %162 = vector.broadcast %cst_79 : f32 to vector<2x5x1xf32>
      %163 = arith.divf %161, %162 : vector<2x5x1xf32>
      %164 = vector.broadcast %163 : vector<2x5x1xf32> to vector<2x5x32xf32>
      %165 = arith.subf %157, %164 : vector<2x5x32xf32>
      %166 = arith.mulf %165, %165 : vector<2x5x32xf32>
      %cst_80 = arith.constant dense<0.000000e+00> : vector<2x5xf32>
      %167 = vector.multi_reduction <add>, %166, %cst_80 [2] : vector<2x5x32xf32> to vector<2x5xf32>
      %168 = vector.shape_cast %167 : vector<2x5xf32> to vector<2x5x1xf32>
      %cst_81 = arith.constant 3.200000e+01 : f32
      %169 = vector.broadcast %cst_81 : f32 to vector<2x5x1xf32>
      %170 = arith.divf %168, %169 : vector<2x5x1xf32>
      %cst_82 = arith.constant 9.99999974E-6 : f32
      %171 = vector.broadcast %cst_82 : f32 to vector<2x5x1xf32>
      %172 = arith.addf %170, %171 : vector<2x5x1xf32>
      %173 = math.rsqrt %172 : vector<2x5x1xf32>
      %174 = vector.broadcast %173 : vector<2x5x1xf32> to vector<2x5x32xf32>
      %175 = arith.mulf %165, %174 : vector<2x5x32xf32>
      %176 = vector.shape_cast %158 : vector<1x32xf32> to vector<1x1x32xf32>
      %177 = vector.broadcast %176 : vector<1x1x32xf32> to vector<2x5x32xf32>
      %178 = arith.mulf %175, %177 : vector<2x5x32xf32>
      %179 = vector.shape_cast %159 : vector<1x32xf32> to vector<1x1x32xf32>
      %180 = vector.broadcast %179 : vector<1x1x32xf32> to vector<2x5x32xf32>
      %181 = arith.addf %178, %180 : vector<2x5x32xf32>
      %182 = vector.shape_cast %181 : vector<2x5x32xf32> to vector<10x32xf32>
      %c0_83 = arith.constant 0 : index
      %c0_84 = arith.constant 0 : index
      %183 = vector.load %arg23[%c0_83, %c0_84] : memref<10x32xf32, #tpu.memory_space<vmem>>, vector<10x32xf32>
      tpu.vector_store %arg23[%c0_83, %c0_84], %182 {strides = array<i32>} : memref<10x32xf32, #tpu.memory_space<vmem>>, vector<10x32xf32>,
    } else {
    }
    %c0 = arith.constant 0 : index
    %c0_1 = arith.constant 0 : index
    %3 = vector.load %arg23[%c0, %c0_1] : memref<10x32xf32, #tpu.memory_space<vmem>>, vector<10x32xf32>
    %c0_2 = arith.constant 0 : index
    %c0_3 = arith.constant 0 : index
    %c0_4 = arith.constant 0 : index
    %4 = vector.load %arg7[%c0_2, %c0_3, %c0_4] : memref<1x1x32xf32, #tpu.memory_space<vmem>>, vector<1x1x32xf32>
    %5 = vector.shape_cast %4 : vector<1x1x32xf32> to vector<1x32xf32>
    %c0_5 = arith.constant 0 : index
    %c0_6 = arith.constant 0 : index
    %c0_7 = arith.constant 0 : index
    %6 = vector.load %arg8[%c0_5, %c0_6, %c0_7] : memref<1x1x32xf32, #tpu.memory_space<vmem>>, vector<1x1x32xf32>
    %7 = vector.shape_cast %6 : vector<1x1x32xf32> to vector<1x32xf32>
    %c0_8 = arith.constant 0 : index
    %c0_9 = arith.constant 0 : index
    %c0_10 = arith.constant 0 : index
    %8 = vector.load %arg9[%c0_8, %c0_9, %c0_10] : memref<1x32x96xbf16, #tpu.memory_space<vmem>>, vector<1x32x96xbf16>
    %9 = vector.shape_cast %8 : vector<1x32x96xbf16> to vector<32x96xbf16>
    %c0_11 = arith.constant 0 : index
    %c0_12 = arith.constant 0 : index
    %c0_13 = arith.constant 0 : index
    %10 = vector.load %arg10[%c0_11, %c0_12, %c0_13] : memref<1x1x96xf32, #tpu.memory_space<vmem>>, vector<1x1x96xf32>
    %11 = vector.shape_cast %10 : vector<1x1x96xf32> to vector<1x96xf32>
    %c0_14 = arith.constant 0 : index
    %c0_15 = arith.constant 0 : index
    %c0_16 = arith.constant 0 : index
    %12 = vector.load %arg11[%c0_14, %c0_15, %c0_16] : memref<1x32x32xbf16, #tpu.memory_space<vmem>>, vector<1x32x32xbf16>
    %13 = vector.shape_cast %12 : vector<1x32x32xbf16> to vector<32x32xbf16>
    %c0_17 = arith.constant 0 : index
    %c0_18 = arith.constant 0 : index
    %c0_19 = arith.constant 0 : index
    %14 = vector.load %arg12[%c0_17, %c0_18, %c0_19] : memref<1x1x32xf32, #tpu.memory_space<vmem>>, vector<1x1x32xf32>
    %15 = vector.shape_cast %14 : vector<1x1x32xf32> to vector<1x32xf32>
    %c0_20 = arith.constant 0 : index
    %c0_21 = arith.constant 0 : index
    %c0_22 = arith.constant 0 : index
    %16 = vector.load %arg13[%c0_20, %c0_21, %c0_22] : memref<1x1x32xf32, #tpu.memory_space<vmem>>, vector<1x1x32xf32>
    %17 = vector.shape_cast %16 : vector<1x1x32xf32> to vector<1x32xf32>
    %c0_23 = arith.constant 0 : index
    %c0_24 = arith.constant 0 : index
    %c0_25 = arith.constant 0 : index
    %18 = vector.load %arg14[%c0_23, %c0_24, %c0_25] : memref<1x1x32xf32, #tpu.memory_space<vmem>>, vector<1x1x32xf32>
    %19 = vector.shape_cast %18 : vector<1x1x32xf32> to vector<1x32xf32>
    %c0_26 = arith.constant 0 : index
    %c0_27 = arith.constant 0 : index
    %c0_28 = arith.constant 0 : index
    %20 = vector.load %arg15[%c0_26, %c0_27, %c0_28] : memref<1x32x128xbf16, #tpu.memory_space<vmem>>, vector<1x32x128xbf16>
    %21 = vector.shape_cast %20 : vector<1x32x128xbf16> to vector<32x128xbf16>
    %c0_29 = arith.constant 0 : index
    %c0_30 = arith.constant 0 : index
    %c0_31 = arith.constant 0 : index
    %22 = vector.load %arg16[%c0_29, %c0_30, %c0_31] : memref<1x1x128xf32, #tpu.memory_space<vmem>>, vector<1x1x128xf32>
    %23 = vector.shape_cast %22 : vector<1x1x128xf32> to vector<1x128xf32>
    %c0_32 = arith.constant 0 : index
    %c0_33 = arith.constant 0 : index
    %c0_34 = arith.constant 0 : index
    %24 = vector.load %arg17[%c0_32, %c0_33, %c0_34] : memref<1x128x32xbf16, #tpu.memory_space<vmem>>, vector<1x128x32xbf16>
    %25 = vector.shape_cast %24 : vector<1x128x32xbf16> to vector<128x32xbf16>
    %c0_35 = arith.constant 0 : index
    %c0_36 = arith.constant 0 : index
    %c0_37 = arith.constant 0 : index
    %26 = vector.load %arg18[%c0_35, %c0_36, %c0_37] : memref<1x1x32xf32, #tpu.memory_space<vmem>>, vector<1x1x32xf32>
    %27 = vector.shape_cast %26 : vector<1x1x32xf32> to vector<1x32xf32>
    %cst = arith.constant dense<0.000000e+00> : vector<10xf32>
    %28 = vector.multi_reduction <add>, %3, %cst [1] : vector<10x32xf32> to vector<10xf32>
    %29 = vector.shape_cast %28 : vector<10xf32> to vector<10x1xf32>
    %cst_38 = arith.constant 3.200000e+01 : f32
    %30 = vector.broadcast %cst_38 : f32 to vector<10x1xf32>
    %31 = arith.divf %29, %30 : vector<10x1xf32>
    %32 = vector.broadcast %31 : vector<10x1xf32> to vector<10x32xf32>
    %33 = arith.subf %3, %32 : vector<10x32xf32>
    %34 = arith.mulf %33, %33 : vector<10x32xf32>
    %cst_39 = arith.constant dense<0.000000e+00> : vector<10xf32>
    %35 = vector.multi_reduction <add>, %34, %cst_39 [1] : vector<10x32xf32> to vector<10xf32>
    %36 = vector.shape_cast %35 : vector<10xf32> to vector<10x1xf32>
    %cst_40 = arith.constant 3.200000e+01 : f32
    %37 = vector.broadcast %cst_40 : f32 to vector<10x1xf32>
    %38 = arith.divf %36, %37 : vector<10x1xf32>
    %cst_41 = arith.constant 9.99999974E-6 : f32
    %39 = vector.broadcast %cst_41 : f32 to vector<10x1xf32>
    %40 = arith.addf %38, %39 : vector<10x1xf32>
    %41 = math.rsqrt %40 : vector<10x1xf32>
    %42 = vector.broadcast %41 : vector<10x1xf32> to vector<10x32xf32>
    %43 = arith.mulf %33, %42 : vector<10x32xf32>
    %44 = vector.broadcast %5 : vector<1x32xf32> to vector<10x32xf32>
    %45 = arith.mulf %43, %44 : vector<10x32xf32>
    %46 = vector.broadcast %7 : vector<1x32xf32> to vector<10x32xf32>
    %47 = arith.addf %45, %46 : vector<10x32xf32>
    %48 = arith.truncf %47 : vector<10x32xf32> to vector<10x32xbf16>
    %cst_42 = arith.constant dense<0.000000e+00> : vector<10x96xf32>
    %49 = tpu.matmul %48, %9, %cst_42 {dimension_numbers = #tpu.dot_dimension_numbers<[1], [0], [0], [1], [0, 0, 1, 1], [], []>} : vector<10x32xbf16>, vector<32x96xbf16>, vector<10x96xf32> -> vector<10x96xf32>
    %50 = vector.broadcast %11 : vector<1x96xf32> to vector<10x96xf32>
    %51 = arith.addf %49, %50 : vector<10x96xf32>
    %52 = vector.extract_strided_slice %51 {offsets = [0, 0], sizes = [10, 16], strides = [1, 1]} : vector<10x96xf32> to vector<10x16xf32>
    %53 = vector.shape_cast %52 : vector<10x16xf32> to vector<2x5x16xf32>
    %54 = arith.truncf %53 : vector<2x5x16xf32> to vector<2x5x16xbf16>
    %55 = vector.extract_strided_slice %51 {offsets = [0, 32], sizes = [10, 16], strides = [1, 1]} : vector<10x96xf32> to vector<10x16xf32>
    %56 = vector.shape_cast %55 : vector<10x16xf32> to vector<2x5x16xf32>
    %57 = arith.truncf %56 : vector<2x5x16xf32> to vector<2x5x16xbf16>
    %58 = vector.extract_strided_slice %51 {offsets = [0, 64], sizes = [10, 16], strides = [1, 1]} : vector<10x96xf32> to vector<10x16xf32>
    %59 = vector.shape_cast %58 : vector<10x16xf32> to vector<2x5x16xf32>
    %60 = arith.truncf %59 : vector<2x5x16xf32> to vector<2x5x16xbf16>
    "tpu.trace_start"() <{level = 10 : i32, message = "bqd,bkd->bqk"}> : () -> ()
    %cst_43 = arith.constant dense<0.000000e+00> : vector<2x5x5xf32>
    %61 = tpu.matmul %54, %57, %cst_43 {dimension_numbers = #tpu.dot_dimension_numbers<[2], [2], [1], [1], [0, 0, 0, 1, 1, 1], [0], [0]>} : vector<2x5x16xbf16>, vector<2x5x16xbf16>, vector<2x5x5xf32> -> vector<2x5x5xf32>
    "tpu.trace_stop"() : () -> ()
    %cst_44 = arith.constant 2.500000e-01 : f32
    %62 = vector.broadcast %cst_44 : f32 to vector<2x5x5xf32>
    %63 = arith.mulf %61, %62 : vector<2x5x5xf32>
    %cst_45 = arith.constant dense<0xFF800000> : vector<2x5xf32>
    %64 = vector.multi_reduction <maximumf>, %63, %cst_45 [2] : vector<2x5x5xf32> to vector<2x5xf32>
    %65 = vector.shape_cast %64 : vector<2x5xf32> to vector<2x5x1xf32>
    %66 = vector.broadcast %65 : vector<2x5x1xf32> to vector<2x5x5xf32>
    %67 = arith.subf %63, %66 : vector<2x5x5xf32>
    %68 = math.exp %67 : vector<2x5x5xf32>
    %cst_46 = arith.constant dense<0.000000e+00> : vector<2x5xf32>
    %69 = vector.multi_reduction <add>, %68, %cst_46 [2] : vector<2x5x5xf32> to vector<2x5xf32>
    %70 = vector.shape_cast %69 : vector<2x5xf32> to vector<2x5x1xf32>
    %71 = tpu.reciprocal %70 {approx = true} : vector<2x5x1xf32> -> vector<2x5x1xf32>
    %72 = vector.broadcast %71 : vector<2x5x1xf32> to vector<2x5x5xf32>
    %73 = arith.mulf %68, %72 : vector<2x5x5xf32>
    %74 = arith.truncf %73 : vector<2x5x5xf32> to vector<2x5x5xbf16>
    "tpu.trace_start"() <{level = 10 : i32, message = "bqk,bkd->bqd"}> : () -> ()
    %cst_47 = arith.constant dense<0.000000e+00> : vector<2x5x16xf32>
    %75 = tpu.matmul %74, %60, %cst_47 {dimension_numbers = #tpu.dot_dimension_numbers<[2], [1], [1], [2], [0, 0, 0, 1, 1, 2], [0], [0]>} : vector<2x5x5xbf16>, vector<2x5x16xbf16>, vector<2x5x16xf32> -> vector<2x5x16xf32>
    "tpu.trace_stop"() : () -> ()
    %76 = vector.extract_strided_slice %51 {offsets = [0, 16], sizes = [10, 16], strides = [1, 1]} : vector<10x96xf32> to vector<10x16xf32>
    %77 = vector.shape_cast %76 : vector<10x16xf32> to vector<2x5x16xf32>
    %78 = arith.truncf %77 : vector<2x5x16xf32> to vector<2x5x16xbf16>
    %79 = vector.extract_strided_slice %51 {offsets = [0, 48], sizes = [10, 16], strides = [1, 1]} : vector<10x96xf32> to vector<10x16xf32>
    %80 = vector.shape_cast %79 : vector<10x16xf32> to vector<2x5x16xf32>
    %81 = arith.truncf %80 : vector<2x5x16xf32> to vector<2x5x16xbf16>
    %82 = vector.extract_strided_slice %51 {offsets = [0, 80], sizes = [10, 16], strides = [1, 1]} : vector<10x96xf32> to vector<10x16xf32>
    %83 = vector.shape_cast %82 : vector<10x16xf32> to vector<2x5x16xf32>
    %84 = arith.truncf %83 : vector<2x5x16xf32> to vector<2x5x16xbf16>
    "tpu.trace_start"() <{level = 10 : i32, message = "bqd,bkd->bqk"}> : () -> ()
    %cst_48 = arith.constant dense<0.000000e+00> : vector<2x5x5xf32>
    %85 = tpu.matmul %78, %81, %cst_48 {dimension_numbers = #tpu.dot_dimension_numbers<[2], [2], [1], [1], [0, 0, 0, 1, 1, 1], [0], [0]>} : vector<2x5x16xbf16>, vector<2x5x16xbf16>, vector<2x5x5xf32> -> vector<2x5x5xf32>
    "tpu.trace_stop"() : () -> ()
    %cst_49 = arith.constant 2.500000e-01 : f32
    %86 = vector.broadcast %cst_49 : f32 to vector<2x5x5xf32>
    %87 = arith.mulf %85, %86 : vector<2x5x5xf32>
    %cst_50 = arith.constant dense<0xFF800000> : vector<2x5xf32>
    %88 = vector.multi_reduction <maximumf>, %87, %cst_50 [2] : vector<2x5x5xf32> to vector<2x5xf32>
    %89 = vector.shape_cast %88 : vector<2x5xf32> to vector<2x5x1xf32>
    %90 = vector.broadcast %89 : vector<2x5x1xf32> to vector<2x5x5xf32>
    %91 = arith.subf %87, %90 : vector<2x5x5xf32>
    %92 = math.exp %91 : vector<2x5x5xf32>
    %cst_51 = arith.constant dense<0.000000e+00> : vector<2x5xf32>
    %93 = vector.multi_reduction <add>, %92, %cst_51 [2] : vector<2x5x5xf32> to vector<2x5xf32>
    %94 = vector.shape_cast %93 : vector<2x5xf32> to vector<2x5x1xf32>
    %95 = tpu.reciprocal %94 {approx = true} : vector<2x5x1xf32> -> vector<2x5x1xf32>
    %96 = vector.broadcast %95 : vector<2x5x1xf32> to vector<2x5x5xf32>
    %97 = arith.mulf %92, %96 : vector<2x5x5xf32>
    %98 = arith.truncf %97 : vector<2x5x5xf32> to vector<2x5x5xbf16>
    "tpu.trace_start"() <{level = 10 : i32, message = "bqk,bkd->bqd"}> : () -> ()
    %cst_52 = arith.constant dense<0.000000e+00> : vector<2x5x16xf32>
    %99 = tpu.matmul %98, %84, %cst_52 {dimension_numbers = #tpu.dot_dimension_numbers<[2], [1], [1], [2], [0, 0, 0, 1, 1, 2], [0], [0]>} : vector<2x5x5xbf16>, vector<2x5x16xbf16>, vector<2x5x16xf32> -> vector<2x5x16xf32>
    "tpu.trace_stop"() : () -> ()
    %100 = tpu.concatenate %75, %99 in 2 : vector<2x5x16xf32>, vector<2x5x16xf32> -> vector<2x5x32xf32>
    %101 = vector.shape_cast %100 : vector<2x5x32xf32> to vector<10x32xf32>
    %102 = arith.truncf %101 : vector<10x32xf32> to vector<10x32xbf16>
    %cst_53 = arith.constant dense<0.000000e+00> : vector<10x32xf32>
    %103 = tpu.matmul %102, %13, %cst_53 {dimension_numbers = #tpu.dot_dimension_numbers<[1], [0], [0], [1], [0, 0, 1, 1], [], []>} : vector<10x32xbf16>, vector<32x32xbf16>, vector<10x32xf32> -> vector<10x32xf32>
    %104 = arith.addf %3, %103 : vector<10x32xf32>
    %105 = vector.broadcast %15 : vector<1x32xf32> to vector<10x32xf32>
    %106 = arith.addf %104, %105 : vector<10x32xf32>
    %cst_54 = arith.constant dense<0.000000e+00> : vector<10xf32>
    %107 = vector.multi_reduction <add>, %106, %cst_54 [1] : vector<10x32xf32> to vector<10xf32>
    %108 = vector.shape_cast %107 : vector<10xf32> to vector<10x1xf32>
    %cst_55 = arith.constant 3.200000e+01 : f32
    %109 = vector.broadcast %cst_55 : f32 to vector<10x1xf32>
    %110 = arith.divf %108, %109 : vector<10x1xf32>
    %111 = vector.broadcast %110 : vector<10x1xf32> to vector<10x32xf32>
    %112 = arith.subf %106, %111 : vector<10x32xf32>
    %113 = arith.mulf %112, %112 : vector<10x32xf32>
    %cst_56 = arith.constant dense<0.000000e+00> : vector<10xf32>
    %114 = vector.multi_reduction <add>, %113, %cst_56 [1] : vector<10x32xf32> to vector<10xf32>
    %115 = vector.shape_cast %114 : vector<10xf32> to vector<10x1xf32>
    %cst_57 = arith.constant 3.200000e+01 : f32
    %116 = vector.broadcast %cst_57 : f32 to vector<10x1xf32>
    %117 = arith.divf %115, %116 : vector<10x1xf32>
    %cst_58 = arith.constant 9.99999974E-6 : f32
    %118 = vector.broadcast %cst_58 : f32 to vector<10x1xf32>
    %119 = arith.addf %117, %118 : vector<10x1xf32>
    %120 = math.rsqrt %119 : vector<10x1xf32>
    %121 = vector.broadcast %120 : vector<10x1xf32> to vector<10x32xf32>
    %122 = arith.mulf %112, %121 : vector<10x32xf32>
    %123 = vector.broadcast %17 : vector<1x32xf32> to vector<10x32xf32>
    %124 = arith.mulf %122, %123 : vector<10x32xf32>
    %125 = vector.broadcast %19 : vector<1x32xf32> to vector<10x32xf32>
    %126 = arith.addf %124, %125 : vector<10x32xf32>
    %127 = arith.truncf %126 : vector<10x32xf32> to vector<10x32xbf16>
    %cst_59 = arith.constant dense<0.000000e+00> : vector<10x128xf32>
    %128 = tpu.matmul %127, %21, %cst_59 {dimension_numbers = #tpu.dot_dimension_numbers<[1], [0], [0], [1], [0, 0, 1, 1], [], []>} : vector<10x32xbf16>, vector<32x128xbf16>, vector<10x128xf32> -> vector<10x128xf32>
    %129 = vector.broadcast %23 : vector<1x128xf32> to vector<10x128xf32>
    %130 = arith.addf %128, %129 : vector<10x128xf32>
    %cst_60 = arith.constant 1.702000e+00 : f32
    %131 = vector.broadcast %cst_60 : f32 to vector<10x128xf32>
    %132 = arith.mulf %131, %130 : vector<10x128xf32>
    %133 = arith.negf %132 : vector<10x128xf32>
    %134 = math.exp %133 : vector<10x128xf32>
    %cst_61 = arith.constant 1.000000e+00 : f32
    %135 = vector.broadcast %cst_61 : f32 to vector<10x128xf32>
    %136 = arith.addf %135, %134 : vector<10x128xf32>
    %137 = arith.divf %135, %136 : vector<10x128xf32>
    %138 = arith.mulf %130, %137 : vector<10x128xf32>
    %139 = arith.truncf %138 : vector<10x128xf32> to vector<10x128xbf16>
    %cst_62 = arith.constant dense<0.000000e+00> : vector<10x32xf32>
    %140 = tpu.matmul %139, %25, %cst_62 {dimension_numbers = #tpu.dot_dimension_numbers<[1], [0], [0], [1], [0, 0, 1, 1], [], []>} : vector<10x128xbf16>, vector<128x32xbf16>, vector<10x32xf32> -> vector<10x32xf32>
    %141 = arith.addf %106, %140 : vector<10x32xf32>
    %142 = vector.broadcast %27 : vector<1x32xf32> to vector<10x32xf32>
    %143 = arith.addf %141, %142 : vector<10x32xf32>
    %c0_63 = arith.constant 0 : index
    %c0_64 = arith.constant 0 : index
    %144 = vector.load %arg23[%c0_63, %c0_64] : memref<10x32xf32, #tpu.memory_space<vmem>>, vector<10x32xf32>
    tpu.vector_store %arg23[%c0_63, %c0_64], %143 {strides = array<i32>} : memref<10x32xf32, #tpu.memory_space<vmem>>, vector<10x32xf32>,
    %c1_i32 = arith.constant 1 : i32
    %145 = arith.cmpi eq, %arg1, %c1_i32 : i32
    %146 = arith.extui %145 : i1 to i32
    %c0_i32_65 = arith.constant 0 : i32
    %147 = arith.cmpi ne, %146, %c0_i32_65 : i32
    scf.if %147 {
      %148 = vector.shape_cast %143 : vector<10x32xf32> to vector<2x5x32xf32>
      %149 = vector.extract_strided_slice %148 {offsets = [0, 0, 0], sizes = [2, 1, 32], strides = [1, 1, 1]} : vector<2x5x32xf32> to vector<2x1x32xf32>
      %150 = vector.shape_cast %149 : vector<2x1x32xf32> to vector<2x32xf32>
      %c0_66 = arith.constant 0 : index
      %c0_67 = arith.constant 0 : index
      %151 = vector.load %arg19[%c0_66, %c0_67] : memref<1x32xf32, #tpu.memory_space<vmem>>, vector<1x32xf32>
      %c0_68 = arith.constant 0 : index
      %c0_69 = arith.constant 0 : index
      %152 = vector.load %arg20[%c0_68, %c0_69] : memref<1x32xf32, #tpu.memory_space<vmem>>, vector<1x32xf32>
      %cst_70 = arith.constant dense<0.000000e+00> : vector<2xf32>
      %153 = vector.multi_reduction <add>, %150, %cst_70 [1] : vector<2x32xf32> to vector<2xf32>
      %154 = vector.shape_cast %153 : vector<2xf32> to vector<2x1xf32>
      %cst_71 = arith.constant 3.200000e+01 : f32
      %155 = vector.broadcast %cst_71 : f32 to vector<2x1xf32>
      %156 = arith.divf %154, %155 : vector<2x1xf32>
      %157 = vector.broadcast %156 : vector<2x1xf32> to vector<2x32xf32>
      %158 = arith.subf %150, %157 : vector<2x32xf32>
      %159 = arith.mulf %158, %158 : vector<2x32xf32>
      %cst_72 = arith.constant dense<0.000000e+00> : vector<2xf32>
      %160 = vector.multi_reduction <add>, %159, %cst_72 [1] : vector<2x32xf32> to vector<2xf32>
      %161 = vector.shape_cast %160 : vector<2xf32> to vector<2x1xf32>
      %cst_73 = arith.constant 3.200000e+01 : f32
      %162 = vector.broadcast %cst_73 : f32 to vector<2x1xf32>
      %163 = arith.divf %161, %162 : vector<2x1xf32>
      %cst_74 = arith.constant 9.99999974E-6 : f32
      %164 = vector.broadcast %cst_74 : f32 to vector<2x1xf32>
      %165 = arith.addf %163, %164 : vector<2x1xf32>
      %166 = math.rsqrt %165 : vector<2x1xf32>
      %167 = vector.broadcast %166 : vector<2x1xf32> to vector<2x32xf32>
      %168 = arith.mulf %158, %167 : vector<2x32xf32>
      %169 = vector.broadcast %151 : vector<1x32xf32> to vector<2x32xf32>
      %170 = arith.mulf %168, %169 : vector<2x32xf32>
      %171 = vector.broadcast %152 : vector<1x32xf32> to vector<2x32xf32>
      %172 = arith.addf %170, %171 : vector<2x32xf32>
      %c0_75 = arith.constant 0 : index
      %c0_76 = arith.constant 0 : index
      %173 = vector.load %arg21[%c0_75, %c0_76] : memref<32x16xbf16, #tpu.memory_space<vmem>>, vector<32x16xbf16>
      %174 = arith.truncf %172 : vector<2x32xf32> to vector<2x32xbf16>
      %cst_77 = arith.constant dense<0.000000e+00> : vector<2x16xf32>
      %175 = tpu.matmul %174, %173, %cst_77 {dimension_numbers = #tpu.dot_dimension_numbers<[1], [0], [0], [1], [0, 0, 1, 1], [], []>} : vector<2x32xbf16>, vector<32x16xbf16>, vector<2x16xf32> -> vector<2x16xf32>
      %c0_78 = arith.constant 0 : index
      %c0_79 = arith.constant 0 : index
      %176 = vector.load %arg22[%c0_78, %c0_79] : memref<2x16xf32, #tpu.memory_space<vmem>>, vector<2x16xf32>
      tpu.vector_store %arg22[%c0_78, %c0_79], %175 {strides = array<i32>} : memref<2x16xf32, #tpu.memory_space<vmem>>, vector<2x16xf32>,
    } else {
    }
    return
  }
  func.func @transform_0(%arg0: i32, %arg1: i32) -> (i32, i32, i32) {
    %c0_i32 = arith.constant 0 : i32
    %c0_i32_0 = arith.constant 0 : i32
    %c0_i32_1 = arith.constant 0 : i32
    return %arg0, %c0_i32, %c0_i32_0 : i32, i32, i32
  }
  func.func @transform_1(%arg0: i32, %arg1: i32) -> (i32, i32) {
    %c0_i32 = arith.constant 0 : i32
    %c0_i32_0 = arith.constant 0 : i32
    %c0_i32_1 = arith.constant 0 : i32
    return %c0_i32, %c0_i32_0 : i32, i32
  }
  func.func @transform_2(%arg0: i32, %arg1: i32) -> (i32, i32) {
    %c0_i32 = arith.constant 0 : i32
    %c0_i32_0 = arith.constant 0 : i32
    %c0_i32_1 = arith.constant 0 : i32
    return %c0_i32, %c0_i32_0 : i32, i32
  }
  func.func @transform_3(%arg0: i32, %arg1: i32) -> (i32, i32) {
    %c0_i32 = arith.constant 0 : i32
    %c0_i32_0 = arith.constant 0 : i32
    %c0_i32_1 = arith.constant 0 : i32
    return %c0_i32, %c0_i32_0 : i32, i32
  }
  func.func @transform_4(%arg0: i32, %arg1: i32) -> (i32, i32) {
    %c0_i32 = arith.constant 0 : i32
    %c0_i32_0 = arith.constant 0 : i32
    %c0_i32_1 = arith.constant 0 : i32
    return %c0_i32, %c0_i32_0 : i32, i32
  }
  func.func @transform_5(%arg0: i32, %arg1: i32) -> (i32, i32, i32) {
    %c0_i32 = arith.constant 0 : i32
    %c0_i32_0 = arith.constant 0 : i32
    %c0_i32_1 = arith.constant 0 : i32
    return %arg1, %c0_i32, %c0_i32_0 : i32, i32, i32
  }
  func.func @transform_6(%arg0: i32, %arg1: i32) -> (i32, i32, i32) {
    %c0_i32 = arith.constant 0 : i32
    %c0_i32_0 = arith.constant 0 : i32
    %c0_i32_1 = arith.constant 0 : i32
    return %arg1, %c0_i32, %c0_i32_0 : i32, i32, i32
  }
  func.func @transform_7(%arg0: i32, %arg1: i32) -> (i32, i32, i32) {
    %c0_i32 = arith.constant 0 : i32
    %c0_i32_0 = arith.constant 0 : i32
    %c0_i32_1 = arith.constant 0 : i32
    return %arg1, %c0_i32, %c0_i32_0 : i32, i32, i32
  }
  func.func @transform_8(%arg0: i32, %arg1: i32) -> (i32, i32, i32) {
    %c0_i32 = arith.constant 0 : i32
    %c0_i32_0 = arith.constant 0 : i32
    %c0_i32_1 = arith.constant 0 : i32
    return %arg1, %c0_i32, %c0_i32_0 : i32, i32, i32
  }
  func.func @transform_9(%arg0: i32, %arg1: i32) -> (i32, i32, i32) {
    %c0_i32 = arith.constant 0 : i32
    %c0_i32_0 = arith.constant 0 : i32
    %c0_i32_1 = arith.constant 0 : i32
    return %arg1, %c0_i32, %c0_i32_0 : i32, i32, i32
  }
  func.func @transform_10(%arg0: i32, %arg1: i32) -> (i32, i32, i32) {
    %c0_i32 = arith.constant 0 : i32
    %c0_i32_0 = arith.constant 0 : i32
    %c0_i32_1 = arith.constant 0 : i32
    return %arg1, %c0_i32, %c0_i32_0 : i32, i32, i32
  }
  func.func @transform_11(%arg0: i32, %arg1: i32) -> (i32, i32, i32) {
    %c0_i32 = arith.constant 0 : i32
    %c0_i32_0 = arith.constant 0 : i32
    %c0_i32_1 = arith.constant 0 : i32
    return %arg1, %c0_i32, %c0_i32_0 : i32, i32, i32
  }
  func.func @transform_12(%arg0: i32, %arg1: i32) -> (i32, i32, i32) {
    %c0_i32 = arith.constant 0 : i32
    %c0_i32_0 = arith.constant 0 : i32
    %c0_i32_1 = arith.constant 0 : i32
    return %arg1, %c0_i32, %c0_i32_0 : i32, i32, i32
  }
  func.func @transform_13(%arg0: i32, %arg1: i32) -> (i32, i32, i32) {
    %c0_i32 = arith.constant 0 : i32
    %c0_i32_0 = arith.constant 0 : i32
    %c0_i32_1 = arith.constant 0 : i32
    return %arg1, %c0_i32, %c0_i32_0 : i32, i32, i32
  }
  func.func @transform_14(%arg0: i32, %arg1: i32) -> (i32, i32, i32) {
    %c0_i32 = arith.constant 0 : i32
    %c0_i32_0 = arith.constant 0 : i32
    %c0_i32_1 = arith.constant 0 : i32
    return %arg1, %c0_i32, %c0_i32_0 : i32, i32, i32
  }
  func.func @transform_15(%arg0: i32, %arg1: i32) -> (i32, i32, i32) {
    %c0_i32 = arith.constant 0 : i32
    %c0_i32_0 = arith.constant 0 : i32
    %c0_i32_1 = arith.constant 0 : i32
    return %arg1, %c0_i32, %c0_i32_0 : i32, i32, i32
  }
  func.func @transform_16(%arg0: i32, %arg1: i32) -> (i32, i32, i32) {
    %c0_i32 = arith.constant 0 : i32
    %c0_i32_0 = arith.constant 0 : i32
    %c0_i32_1 = arith.constant 0 : i32
    return %arg1, %c0_i32, %c0_i32_0 : i32, i32, i32
  }
  func.func @transform_17(%arg0: i32, %arg1: i32) -> (i32, i32) {
    %c0_i32 = arith.constant 0 : i32
    %c0_i32_0 = arith.constant 0 : i32
    %c0_i32_1 = arith.constant 0 : i32
    return %c0_i32, %c0_i32_0 : i32, i32
  }
  func.func @transform_18(%arg0: i32, %arg1: i32) -> (i32, i32) {
    %c0_i32 = arith.constant 0 : i32
    %c0_i32_0 = arith.constant 0 : i32
    %c0_i32_1 = arith.constant 0 : i32
    return %c0_i32, %c0_i32_0 : i32, i32
  }
  func.func @transform_19(%arg0: i32, %arg1: i32) -> (i32, i32) {
    %c0_i32 = arith.constant 0 : i32
    %c0_i32_0 = arith.constant 0 : i32
    %c0_i32_1 = arith.constant 0 : i32
    return %c0_i32, %c0_i32_0 : i32, i32
  }
  func.func @transform_20(%arg0: i32, %arg1: i32) -> (i32, i32) {
    %c0_i32 = arith.constant 0 : i32
    %c0_i32_0 = arith.constant 0 : i32
    return %arg0, %c0_i32 : i32, i32
  }
}

</mosaic_0001>

<llo_original>
// kernel: tpu_custom_call.1
$region0: #{tpu_custom_call.1}
  #allocation0 [shape = 'u32[]', space=smem, size = 0x4, offset = 0x4, fixed_abs, tag = 'smem constant byte address 0x4 - core index']
  #allocation1 [shape = 'u32[72,128]{1,0:T(1,128)}', space=vmem, size = 0x9000, scoped, tag = 'internal scratch']
  #allocation2 [shape = 'f32[10,32]{1,0:T(8,128)}', space=vmem, size = 0x2000, scoped, tag = 'scratch operand']
  %s0 = inlined_call_operand.vmem [shape: f32[2,5,192], index: 0, kind: input, shape index: {}]
  %s1 = inlined_call_operand.vmem [shape: bf16[192,32], index: 1, kind: input, shape index: {}]
  %s2 = inlined_call_operand.vmem [shape: f32[5,32], index: 2, kind: input, shape index: {}]
  %s3 = inlined_call_operand.vmem [shape: f32[1,32], index: 3, kind: input, shape index: {}]
  %s4 = inlined_call_operand.vmem [shape: f32[1,32], index: 4, kind: input, shape index: {}]
  %s5 = inlined_call_operand.vmem [shape: f32[2,1,32], index: 5, kind: input, shape index: {}]
  %s6 = inlined_call_operand.vmem [shape: f32[2,1,32], index: 6, kind: input, shape index: {}]
  %s7 = inlined_call_operand.vmem [shape: bf16[2,32,96], index: 7, kind: input, shape index: {}]
  %s8 = inlined_call_operand.vmem [shape: f32[2,1,96], index: 8, kind: input, shape index: {}]
  %s9 = inlined_call_operand.vmem [shape: bf16[2,32,32], index: 9, kind: input, shape index: {}]
  %s10 = inlined_call_operand.vmem [shape: f32[2,1,32], index: 10, kind: input, shape index: {}]
  %s11 = inlined_call_operand.vmem [shape: f32[2,1,32], index: 11, kind: input, shape index: {}]
  %s12 = inlined_call_operand.vmem [shape: f32[2,1,32], index: 12, kind: input, shape index: {}]
  %s13 = inlined_call_operand.vmem [shape: bf16[2,32,128], index: 13, kind: input, shape index: {}]
  %s14 = inlined_call_operand.vmem [shape: f32[2,1,128], index: 14, kind: input, shape index: {}]
  %s15 = inlined_call_operand.vmem [shape: bf16[2,128,32], index: 15, kind: input, shape index: {}]
  %s16 = inlined_call_operand.vmem [shape: f32[2,1,32], index: 16, kind: input, shape index: {}]
  %s17 = inlined_call_operand.vmem [shape: f32[1,32], index: 17, kind: input, shape index: {}]
  %s18 = inlined_call_operand.vmem [shape: f32[1,32], index: 18, kind: input, shape index: {}]
  %s19 = inlined_call_operand.vmem [shape: bf16[32,16], index: 19, kind: input, shape index: {}]
  %s20 = inlined_call_operand.hbm [shape: f32[2,16], index: 20, kind: output, shape index: {}]
  %s21 = sld [smem:[#allocation0]]
  $region121: #{tpu_custom_call.1} parent=0
    _
  %s23 = ssub.s32 1, %s21
  %s24 = scalar_select 0, %s23, %s21
  $region1: #{tpu_custom_call.1} parent=0
    #allocation3 [shape = 'u8[1024]{0}', space=vmem, size = 0x400, scoped, tag = 'output window, operand 0, single buffered']
    #allocation4 [shape = 's32[2]{0}', space=sflag, size = 0x8, scoped, tag = 'scoped memory for tpu_custom_call.1']
    %25 = vsyncpa [#allocation4], 0
    loop: start=0, step=1, limit=4
    $region2: #{tpu_custom_call.1} parent=1 // loop_pre_header
      _
    $region3: #{tpu_custom_call.1} parent=1 // loop_header
      %s27 = sphi 0, %s31
      %p28 = scmp.ge.s32.totalorder %s27, 4
      %s34 = sphi 0, %s46
      %s35 = sphi 0, %s42
      %s36 = sphi 0, %s34
      %s37 = sphi 0, %s35
      %s38 = sphi 0, %s36
      %s39 = sphi 0, %s37
      %s49 = sphi 0, %s51
      %s52 = sphi 0, %s49
      %s53 = sphi 0, %s52
      %s69 = sphi 0, %s53
      %s73 = sphi 0, %s73
      %s75 = sphi 0, %s73
      %s76 = sphi 0, %s75
      %s90 = sphi 0, %s76
      %s94 = sphi 0, %s94
      %s96 = sphi 0, %s94
      %s97 = sphi 0, %s96
      %s111 = sphi 0, %s97
      %s115 = sphi 0, %s115
      %s117 = sphi 0, %s115
      %s118 = sphi 0, %s117
      %s132 = sphi 0, %s118
      %s136 = sphi 0, %s136
      %s138 = sphi 0, %s136
      %s139 = sphi 0, %s138
      %s153 = sphi 0, %s139
      %s159 = sphi 0, %s161
      %s162 = sphi 0, %s159
      %s163 = sphi 0, %s162
      %s179 = sphi 0, %s163
      %s185 = sphi 0, %s187
      %s188 = sphi 0, %s185
      %s189 = sphi 0, %s188
      %s205 = sphi 0, %s189
      %s211 = sphi 0, %s213
      %s214 = sphi 0, %s211
      %s215 = sphi 0, %s214
      %s231 = sphi 0, %s215
      %s237 = sphi 0, %s239
      %s240 = sphi 0, %s237
      %s241 = sphi 0, %s240
      %s257 = sphi 0, %s241
      %s263 = sphi 0, %s265
      %s266 = sphi 0, %s263
      %s267 = sphi 0, %s266
      %s283 = sphi 0, %s267
      %s289 = sphi 0, %s291
      %s292 = sphi 0, %s289
      %s293 = sphi 0, %s292
      %s309 = sphi 0, %s293
      %s315 = sphi 0, %s317
      %s318 = sphi 0, %s315
      %s319 = sphi 0, %s318
      %s335 = sphi 0, %s319
      %s341 = sphi 0, %s343
      %s344 = sphi 0, %s341
      %s345 = sphi 0, %s344
      %s361 = sphi 0, %s345
      %s367 = sphi 0, %s369
      %s370 = sphi 0, %s367
      %s371 = sphi 0, %s370
      %s387 = sphi 0, %s371
      %s393 = sphi 0, %s395
      %s396 = sphi 0, %s393
      %s397 = sphi 0, %s396
      %s413 = sphi 0, %s397
      %s419 = sphi 0, %s421
      %s422 = sphi 0, %s419
      %s423 = sphi 0, %s422
      %s439 = sphi 0, %s423
      %s445 = sphi 0, %s447
      %s448 = sphi 0, %s445
      %s449 = sphi 0, %s448
      %s465 = sphi 0, %s449
      %s469 = sphi 0, %s469
      %s471 = sphi 0, %s469
      %s472 = sphi 0, %s471
      %s486 = sphi 0, %s472
      %s490 = sphi 0, %s490
      %s492 = sphi 0, %s490
      %s493 = sphi 0, %s492
      %s507 = sphi 0, %s493
      %s511 = sphi 0, %s511
      %s513 = sphi 0, %s511
      %s514 = sphi 0, %s513
      %s528 = sphi 0, %s514
      %s534 = sphi 0, %s536
      %s537 = sphi 0, %s534
      %s538 = sphi 0, %s537
      %s554 = sphi 0, %s538
    $region4: #{tpu_custom_call.1} parent=1 // loop_header_branch
      %30 = sbr.rel (%p28) target = $region8
    $region5: #{tpu_custom_call.1} parent=1 // loop_body
      %s32 = ssub.s32 %s27, 1
      %s33 = ssub.s32 %s27, 2
      %s40 = sadd.s32 1, %s35
      %p41 = scmp.ge.s32.totalorder %s40, 2
      %s42 = scalar_select %p41, 0, %s40
      %s43 = sadd.s32 1, %s34
      %s44 = scalar_select %p41, %s43, %s34
      %p45 = scmp.ge.s32.totalorder %s44, 1
      %s46 = scalar_select %p45, 0, %s44
      %s47 = ssub.s32 %s34, %s46
      %p48 = scmp.eq.s32.totalorder %s47, 0
      %s50 = sadd.s32 %s49, 1
      %s51 = scalar_select %p48, %s49, %s50
      %p54 = pneg %p48
      %p55 = scmp.eq.s32.totalorder %s27, 1
      %p56 = por %p54, %p55
      %p57 = scmp.ne.s32.totalorder %s49, %s52
      %p58 = scmp.eq.s32.totalorder %s27, 0
      %p59 = por %p57, %p58
      %p60 = scmp.ne.s32.totalorder %s49, %s52
      %p61 = scmp.eq.s32.totalorder %s32, 1
      %p62 = por %p60, %p61
      %p63 = scmp.ne.s32.totalorder %s52, %s53
      %p64 = scmp.eq.s32.totalorder %s32, 0
      %p65 = por %p63, %p64
      %p66 = scmp.ne.s32.totalorder %s52, %s53
      %p67 = scmp.eq.s32.totalorder %s33, 1
      %p68 = por %p66, %p67
      %p70 = scmp.ne.s32.totalorder %s53, %s69
      %p71 = scmp.eq.s32.totalorder %s33, 0
      %p72 = por %p70, %p71
      %s74 = sadd.s32 %s73, 1
      %p77 = scmp.eq.s32.totalorder %s27, 1
      %p78 = scmp.ne.s32.totalorder %s73, %s75
      %p79 = scmp.eq.s32.totalorder %s27, 0
      %p80 = por %p78, %p79
      %p81 = scmp.ne.s32.totalorder %s73, %s75
      %p82 = scmp.eq.s32.totalorder %s32, 1
      %p83 = por %p81, %p82
      %p84 = scmp.ne.s32.totalorder %s75, %s76
      %p85 = scmp.eq.s32.totalorder %s32, 0
      %p86 = por %p84, %p85
      %p87 = scmp.ne.s32.totalorder %s75, %s76
      %p88 = scmp.eq.s32.totalorder %s33, 1
      %p89 = por %p87, %p88
      %p91 = scmp.ne.s32.totalorder %s76, %s90
      %p92 = scmp.eq.s32.totalorder %s33, 0
      %p93 = por %p91, %p92
      %s95 = sadd.s32 %s94, 1
      %p98 = scmp.eq.s32.totalorder %s27, 1
      %p99 = scmp.ne.s32.totalorder %s94, %s96
      %p100 = scmp.eq.s32.totalorder %s27, 0
      %p101 = por %p99, %p100
      %p102 = scmp.ne.s32.totalorder %s94, %s96
      %p103 = scmp.eq.s32.totalorder %s32, 1
      %p104 = por %p102, %p103
      %p105 = scmp.ne.s32.totalorder %s96, %s97
      %p106 = scmp.eq.s32.totalorder %s32, 0
      %p107 = por %p105, %p106
      %p108 = scmp.ne.s32.totalorder %s96, %s97
      %p109 = scmp.eq.s32.totalorder %s33, 1
      %p110 = por %p108, %p109
      %p112 = scmp.ne.s32.totalorder %s97, %s111
      %p113 = scmp.eq.s32.totalorder %s33, 0
      %p114 = por %p112, %p113
      %s116 = sadd.s32 %s115, 1
      %p119 = scmp.eq.s32.totalorder %s27, 1
      %p120 = scmp.ne.s32.totalorder %s115, %s117
      %p121 = scmp.eq.s32.totalorder %s27, 0
      %p122 = por %p120, %p121
      %p123 = scmp.ne.s32.totalorder %s115, %s117
      %p124 = scmp.eq.s32.totalorder %s32, 1
      %p125 = por %p123, %p124
      %p126 = scmp.ne.s32.totalorder %s117, %s118
      %p127 = scmp.eq.s32.totalorder %s32, 0
      %p128 = por %p126, %p127
      %p129 = scmp.ne.s32.totalorder %s117, %s118
      %p130 = scmp.eq.s32.totalorder %s33, 1
      %p131 = por %p129, %p130
      %p133 = scmp.ne.s32.totalorder %s118, %s132
      %p134 = scmp.eq.s32.totalorder %s33, 0
      %p135 = por %p133, %p134
      %s137 = sadd.s32 %s136, 1
      %p140 = scmp.eq.s32.totalorder %s27, 1
      %p141 = scmp.ne.s32.totalorder %s136, %s138
      %p142 = scmp.eq.s32.totalorder %s27, 0
      %p143 = por %p141, %p142
      %p144 = scmp.ne.s32.totalorder %s136, %s138
      %p145 = scmp.eq.s32.totalorder %s32, 1
      %p146 = por %p144, %p145
      %p147 = scmp.ne.s32.totalorder %s138, %s139
      %p148 = scmp.eq.s32.totalorder %s32, 0
      %p149 = por %p147, %p148
      %p150 = scmp.ne.s32.totalorder %s138, %s139
      %p151 = scmp.eq.s32.totalorder %s33, 1
      %p152 = por %p150, %p151
      %p154 = scmp.ne.s32.totalorder %s139, %s153
      %p155 = scmp.eq.s32.totalorder %s33, 0
      %p156 = por %p154, %p155
      %s157 = ssub.s32 %s35, %s42
      %p158 = scmp.eq.s32.totalorder %s157, 0
      %s160 = sadd.s32 %s159, 1
      %s161 = scalar_select %p158, %s159, %s160
      %p164 = pneg %p158
      %p165 = scmp.eq.s32.totalorder %s27, 1
      %p166 = por %p164, %p165
      %p167 = scmp.ne.s32.totalorder %s159, %s162
      %p168 = scmp.eq.s32.totalorder %s27, 0
      %p169 = por %p167, %p168
      %p170 = scmp.ne.s32.totalorder %s159, %s162
      %p171 = scmp.eq.s32.totalorder %s32, 1
      %p172 = por %p170, %p171
      %p173 = scmp.ne.s32.totalorder %s162, %s163
      %p174 = scmp.eq.s32.totalorder %s32, 0
      %p175 = por %p173, %p174
      %p176 = scmp.ne.s32.totalorder %s162, %s163
      %p177 = scmp.eq.s32.totalorder %s33, 1
      %p178 = por %p176, %p177
      %p180 = scmp.ne.s32.totalorder %s163, %s179
      %p181 = scmp.eq.s32.totalorder %s33, 0
      %p182 = por %p180, %p181
      %s183 = ssub.s32 %s35, %s42
      %p184 = scmp.eq.s32.totalorder %s183, 0
      %s186 = sadd.s32 %s185, 1
      %s187 = scalar_select %p184, %s185, %s186
      %p190 = pneg %p184
      %p191 = scmp.eq.s32.totalorder %s27, 1
      %p192 = por %p190, %p191
      %p193 = scmp.ne.s32.totalorder %s185, %s188
      %p194 = scmp.eq.s32.totalorder %s27, 0
      %p195 = por %p193, %p194
      %p196 = scmp.ne.s32.totalorder %s185, %s188
      %p197 = scmp.eq.s32.totalorder %s32, 1
      %p198 = por %p196, %p197
      %p199 = scmp.ne.s32.totalorder %s188, %s189
      %p200 = scmp.eq.s32.totalorder %s32, 0
      %p201 = por %p199, %p200
      %p202 = scmp.ne.s32.totalorder %s188, %s189
      %p203 = scmp.eq.s32.totalorder %s33, 1
      %p204 = por %p202, %p203
      %p206 = scmp.ne.s32.totalorder %s189, %s205
      %p207 = scmp.eq.s32.totalorder %s33, 0
      %p208 = por %p206, %p207
      %s209 = ssub.s32 %s35, %s42
      %p210 = scmp.eq.s32.totalorder %s209, 0
      %s212 = sadd.s32 %s211, 1
      %s213 = scalar_select %p210, %s211, %s212
      %p216 = pneg %p210
      %p217 = scmp.eq.s32.totalorder %s27, 1
      %p218 = por %p216, %p217
      %p219 = scmp.ne.s32.totalorder %s211, %s214
      %p220 = scmp.eq.s32.totalorder %s27, 0
      %p221 = por %p219, %p220
      %p222 = scmp.ne.s32.totalorder %s211, %s214
      %p223 = scmp.eq.s32.totalorder %s32, 1
      %p224 = por %p222, %p223
      %p225 = scmp.ne.s32.totalorder %s214, %s215
      %p226 = scmp.eq.s32.totalorder %s32, 0
      %p227 = por %p225, %p226
      %p228 = scmp.ne.s32.totalorder %s214, %s215
      %p229 = scmp.eq.s32.totalorder %s33, 1
      %p230 = por %p228, %p229
      %p232 = scmp.ne.s32.totalorder %s215, %s231
      %p233 = scmp.eq.s32.totalorder %s33, 0
      %p234 = por %p232, %p233
      %s235 = ssub.s32 %s35, %s42
      %p236 = scmp.eq.s32.totalorder %s235, 0
      %s238 = sadd.s32 %s237, 1
      %s239 = scalar_select %p236, %s237, %s238
      %p242 = pneg %p236
      %p243 = scmp.eq.s32.totalorder %s27, 1
      %p244 = por %p242, %p243
      %p245 = scmp.ne.s32.totalorder %s237, %s240
      %p246 = scmp.eq.s32.totalorder %s27, 0
      %p247 = por %p245, %p246
      %p248 = scmp.ne.s32.totalorder %s237, %s240
      %p249 = scmp.eq.s32.totalorder %s32, 1
      %p250 = por %p248, %p249
      %p251 = scmp.ne.s32.totalorder %s240, %s241
      %p252 = scmp.eq.s32.totalorder %s32, 0
      %p253 = por %p251, %p252
      %p254 = scmp.ne.s32.totalorder %s240, %s241
      %p255 = scmp.eq.s32.totalorder %s33, 1
      %p256 = por %p254, %p255
      %p258 = scmp.ne.s32.totalorder %s241, %s257
      %p259 = scmp.eq.s32.totalorder %s33, 0
      %p260 = por %p258, %p259
      %s261 = ssub.s32 %s35, %s42
      %p262 = scmp.eq.s32.totalorder %s261, 0
      %s264 = sadd.s32 %s263, 1
      %s265 = scalar_select %p262, %s263, %s264
      %p268 = pneg %p262
      %p269 = scmp.eq.s32.totalorder %s27, 1
      %p270 = por %p268, %p269
      %p271 = scmp.ne.s32.totalorder %s263, %s266
      %p272 = scmp.eq.s32.totalorder %s27, 0
      %p273 = por %p271, %p272
      %p274 = scmp.ne.s32.totalorder %s263, %s266
      %p275 = scmp.eq.s32.totalorder %s32, 1
      %p276 = por %p274, %p275
      %p277 = scmp.ne.s32.totalorder %s266, %s267
      %p278 = scmp.eq.s32.totalorder %s32, 0
      %p279 = por %p277, %p278
      %p280 = scmp.ne.s32.totalorder %s266, %s267
      %p281 = scmp.eq.s32.totalorder %s33, 1
      %p282 = por %p280, %p281
      %p284 = scmp.ne.s32.totalorder %s267, %s283
      %p285 = scmp.eq.s32.totalorder %s33, 0
      %p286 = por %p284, %p285
      %s287 = ssub.s32 %s35, %s42
      %p288 = scmp.eq.s32.totalorder %s287, 0
      %s290 = sadd.s32 %s289, 1
      %s291 = scalar_select %p288, %s289, %s290
      %p294 = pneg %p288
      %p295 = scmp.eq.s32.totalorder %s27, 1
      %p296 = por %p294, %p295
      %p297 = scmp.ne.s32.totalorder %s289, %s292
      %p298 = scmp.eq.s32.totalorder %s27, 0
      %p299 = por %p297, %p298
      %p300 = scmp.ne.s32.totalorder %s289, %s292
      %p301 = scmp.eq.s32.totalorder %s32, 1
      %p302 = por %p300, %p301
      %p303 = scmp.ne.s32.totalorder %s292, %s293
      %p304 = scmp.eq.s32.totalorder %s32, 0
      %p305 = por %p303, %p304
      %p306 = scmp.ne.s32.totalorder %s292, %s293
      %p307 = scmp.eq.s32.totalorder %s33, 1
      %p308 = por %p306, %p307
      %p310 = scmp.ne.s32.totalorder %s293, %s309
      %p311 = scmp.eq.s32.totalorder %s33, 0
      %p312 = por %p310, %p311
      %s313 = ssub.s32 %s35, %s42
      %p314 = scmp.eq.s32.totalorder %s313, 0
      %s316 = sadd.s32 %s315, 1
      %s317 = scalar_select %p314, %s315, %s316
      %p320 = pneg %p314
      %p321 = scmp.eq.s32.totalorder %s27, 1
      %p322 = por %p320, %p321
      %p323 = scmp.ne.s32.totalorder %s315, %s318
      %p324 = scmp.eq.s32.totalorder %s27, 0
      %p325 = por %p323, %p324
      %p326 = scmp.ne.s32.totalorder %s315, %s318
      %p327 = scmp.eq.s32.totalorder %s32, 1
      %p328 = por %p326, %p327
      %p329 = scmp.ne.s32.totalorder %s318, %s319
      %p330 = scmp.eq.s32.totalorder %s32, 0
      %p331 = por %p329, %p330
      %p332 = scmp.ne.s32.totalorder %s318, %s319
      %p333 = scmp.eq.s32.totalorder %s33, 1
      %p334 = por %p332, %p333
      %p336 = scmp.ne.s32.totalorder %s319, %s335
      %p337 = scmp.eq.s32.totalorder %s33, 0
      %p338 = por %p336, %p337
      %s339 = ssub.s32 %s35, %s42
      %p340 = scmp.eq.s32.totalorder %s339, 0
      %s342 = sadd.s32 %s341, 1
      %s343 = scalar_select %p340, %s341, %s342
      %p346 = pneg %p340
      %p347 = scmp.eq.s32.totalorder %s27, 1
      %p348 = por %p346, %p347
      %p349 = scmp.ne.s32.totalorder %s341, %s344
      %p350 = scmp.eq.s32.totalorder %s27, 0
      %p351 = por %p349, %p350
      %p352 = scmp.ne.s32.totalorder %s341, %s344
      %p353 = scmp.eq.s32.totalorder %s32, 1
      %p354 = por %p352, %p353
      %p355 = scmp.ne.s32.totalorder %s344, %s345
      %p356 = scmp.eq.s32.totalorder %s32, 0
      %p357 = por %p355, %p356
      %p358 = scmp.ne.s32.totalorder %s344, %s345
      %p359 = scmp.eq.s32.totalorder %s33, 1
      %p360 = por %p358, %p359
      %p362 = scmp.ne.s32.totalorder %s345, %s361
      %p363 = scmp.eq.s32.totalorder %s33, 0
      %p364 = por %p362, %p363
      %s365 = ssub.s32 %s35, %s42
      %p366 = scmp.eq.s32.totalorder %s365, 0
      %s368 = sadd.s32 %s367, 1
      %s369 = scalar_select %p366, %s367, %s368
      %p372 = pneg %p366
      %p373 = scmp.eq.s32.totalorder %s27, 1
      %p374 = por %p372, %p373
      %p375 = scmp.ne.s32.totalorder %s367, %s370
      %p376 = scmp.eq.s32.totalorder %s27, 0
      %p377 = por %p375, %p376
      %p378 = scmp.ne.s32.totalorder %s367, %s370
      %p379 = scmp.eq.s32.totalorder %s32, 1
      %p380 = por %p378, %p379
      %p381 = scmp.ne.s32.totalorder %s370, %s371
      %p382 = scmp.eq.s32.totalorder %s32, 0
      %p383 = por %p381, %p382
      %p384 = scmp.ne.s32.totalorder %s370, %s371
      %p385 = scmp.eq.s32.totalorder %s33, 1
      %p386 = por %p384, %p385
      %p388 = scmp.ne.s32.totalorder %s371, %s387
      %p389 = scmp.eq.s32.totalorder %s33, 0
      %p390 = por %p388, %p389
      %s391 = ssub.s32 %s35, %s42
      %p392 = scmp.eq.s32.totalorder %s391, 0
      %s394 = sadd.s32 %s393, 1
      %s395 = scalar_select %p392, %s393, %s394
      %p398 = pneg %p392
      %p399 = scmp.eq.s32.totalorder %s27, 1
      %p400 = por %p398, %p399
      %p401 = scmp.ne.s32.totalorder %s393, %s396
      %p402 = scmp.eq.s32.totalorder %s27, 0
      %p403 = por %p401, %p402
      %p404 = scmp.ne.s32.totalorder %s393, %s396
      %p405 = scmp.eq.s32.totalorder %s32, 1
      %p406 = por %p404, %p405
      %p407 = scmp.ne.s32.totalorder %s396, %s397
      %p408 = scmp.eq.s32.totalorder %s32, 0
      %p409 = por %p407, %p408
      %p410 = scmp.ne.s32.totalorder %s396, %s397
      %p411 = scmp.eq.s32.totalorder %s33, 1
      %p412 = por %p410, %p411
      %p414 = scmp.ne.s32.totalorder %s397, %s413
      %p415 = scmp.eq.s32.totalorder %s33, 0
      %p416 = por %p414, %p415
      %s417 = ssub.s32 %s35, %s42
      %p418 = scmp.eq.s32.totalorder %s417, 0
      %s420 = sadd.s32 %s419, 1
      %s421 = scalar_select %p418, %s419, %s420
      %p424 = pneg %p418
      %p425 = scmp.eq.s32.totalorder %s27, 1
      %p426 = por %p424, %p425
      %p427 = scmp.ne.s32.totalorder %s419, %s422
      %p428 = scmp.eq.s32.totalorder %s27, 0
      %p429 = por %p427, %p428
      %p430 = scmp.ne.s32.totalorder %s419, %s422
      %p431 = scmp.eq.s32.totalorder %s32, 1
      %p432 = por %p430, %p431
      %p433 = scmp.ne.s32.totalorder %s422, %s423
      %p434 = scmp.eq.s32.totalorder %s32, 0
      %p435 = por %p433, %p434
      %p436 = scmp.ne.s32.totalorder %s422, %s423
      %p437 = scmp.eq.s32.totalorder %s33, 1
      %p438 = por %p436, %p437
      %p440 = scmp.ne.s32.totalorder %s423, %s439
      %p441 = scmp.eq.s32.totalorder %s33, 0
      %p442 = por %p440, %p441
      %s443 = ssub.s32 %s35, %s42
      %p444 = scmp.eq.s32.totalorder %s443, 0
      %s446 = sadd.s32 %s445, 1
      %s447 = scalar_select %p444, %s445, %s446
      %p450 = pneg %p444
      %p451 = scmp.eq.s32.totalorder %s27, 1
      %p452 = por %p450, %p451
      %p453 = scmp.ne.s32.totalorder %s445, %s448
      %p454 = scmp.eq.s32.totalorder %s27, 0
      %p455 = por %p453, %p454
      %p456 = scmp.ne.s32.totalorder %s445, %s448
      %p457 = scmp.eq.s32.totalorder %s32, 1
      %p458 = por %p456, %p457
      %p459 = scmp.ne.s32.totalorder %s448, %s449
      %p460 = scmp.eq.s32.totalorder %s32, 0
      %p461 = por %p459, %p460
      %p462 = scmp.ne.s32.totalorder %s448, %s449
      %p463 = scmp.eq.s32.totalorder %s33, 1
      %p464 = por %p462, %p463
      %p466 = scmp.ne.s32.totalorder %s449, %s465
      %p467 = scmp.eq.s32.totalorder %s33, 0
      %p468 = por %p466, %p467
      %s470 = sadd.s32 %s469, 1
      %p473 = scmp.eq.s32.totalorder %s27, 1
      %p474 = scmp.ne.s32.totalorder %s469, %s471
      %p475 = scmp.eq.s32.totalorder %s27, 0
      %p476 = por %p474, %p475
      %p477 = scmp.ne.s32.totalorder %s469, %s471
      %p478 = scmp.eq.s32.totalorder %s32, 1
      %p479 = por %p477, %p478
      %p480 = scmp.ne.s32.totalorder %s471, %s472
      %p481 = scmp.eq.s32.totalorder %s32, 0
      %p482 = por %p480, %p481
      %p483 = scmp.ne.s32.totalorder %s471, %s472
      %p484 = scmp.eq.s32.totalorder %s33, 1
      %p485 = por %p483, %p484
      %p487 = scmp.ne.s32.totalorder %s472, %s486
      %p488 = scmp.eq.s32.totalorder %s33, 0
      %p489 = por %p487, %p488
      %s491 = sadd.s32 %s490, 1
      %p494 = scmp.eq.s32.totalorder %s27, 1
      %p495 = scmp.ne.s32.totalorder %s490, %s492
      %p496 = scmp.eq.s32.totalorder %s27, 0
      %p497 = por %p495, %p496
      %p498 = scmp.ne.s32.totalorder %s490, %s492
      %p499 = scmp.eq.s32.totalorder %s32, 1
      %p500 = por %p498, %p499
      %p501 = scmp.ne.s32.totalorder %s492, %s493
      %p502 = scmp.eq.s32.totalorder %s32, 0
      %p503 = por %p501, %p502
      %p504 = scmp.ne.s32.totalorder %s492, %s493
      %p505 = scmp.eq.s32.totalorder %s33, 1
      %p506 = por %p504, %p505
      %p508 = scmp.ne.s32.totalorder %s493, %s507
      %p509 = scmp.eq.s32.totalorder %s33, 0
      %p510 = por %p508, %p509
      %s512 = sadd.s32 %s511, 1
      %p515 = scmp.eq.s32.totalorder %s27, 1
      %p516 = scmp.ne.s32.totalorder %s511, %s513
      %p517 = scmp.eq.s32.totalorder %s27, 0
      %p518 = por %p516, %p517
      %p519 = scmp.ne.s32.totalorder %s511, %s513
      %p520 = scmp.eq.s32.totalorder %s32, 1
      %p521 = por %p519, %p520
      %p522 = scmp.ne.s32.totalorder %s513, %s514
      %p523 = scmp.eq.s32.totalorder %s32, 0
      %p524 = por %p522, %p523
      %p525 = scmp.ne.s32.totalorder %s513, %s514
      %p526 = scmp.eq.s32.totalorder %s33, 1
      %p527 = por %p525, %p526
      %p529 = scmp.ne.s32.totalorder %s514, %s528
      %p530 = scmp.eq.s32.totalorder %s33, 0
      %p531 = por %p529, %p530
      %s532 = ssub.s32 %s34, %s46
      %p533 = scmp.eq.s32.totalorder %s532, 0
      %s535 = sadd.s32 %s534, 1
      %s536 = scalar_select %p533, %s534, %s535
      %p539 = pneg %p533
      %p540 = scmp.eq.s32.totalorder %s27, 1
      %p541 = por %p539, %p540
      %p542 = scmp.ne.s32.totalorder %s534, %s537
      %p543 = scmp.eq.s32.totalorder %s27, 0
      %p544 = por %p542, %p543
      %p545 = scmp.ne.s32.totalorder %s534, %s537
      %p546 = scmp.eq.s32.totalorder %s32, 1
      %p547 = por %p545, %p546
      %p548 = scmp.ne.s32.totalorder %s537, %s538
      %p549 = scmp.eq.s32.totalorder %s32, 0
      %p550 = por %p548, %p549
      %p551 = scmp.ne.s32.totalorder %s537, %s538
      %p552 = scmp.eq.s32.totalorder %s33, 1
      %p553 = por %p551, %p552
      %p555 = scmp.ne.s32.totalorder %s538, %s554
      %p556 = scmp.eq.s32.totalorder %s33, 0
      %p557 = por %p555, %p556
      %p558 = scmp.le.s32.totalorder 1, %s27
      %p559 = scmp.lt.s32.totalorder %s27, 3
      %p560 = pnand %p558, %p559
      %p561 = pneg %p560
      // Predicated region
      $region9: #{tpu_custom_call.1} parent=5 // pred_check
        _
      $region10: #{tpu_custom_call.1} parent=5 // pred_check_branch
        %563 = sbr.rel (%p560) target = $region12
      $region11: #{tpu_custom_call.1} parent=5 // pred_region
        %s564 = ssub.s32 %s27, 1
        // Predicated region
        $region13: #{tpu_custom_call.1} parent=11 // pred_check
          %p565 = pneg %p65
        $region14: #{tpu_custom_call.1} parent=11 // pred_check_branch
          %567 = sbr.rel (%p565) target = $region16
        $region15: #{tpu_custom_call.1} parent=11 // pred_region
          %s568 = smul.u32 2, %s36
          %p569 = scmp.lt.s32.totalorder %s568, 1
          %s570 = scalar_select %p569, %s568, 1
          %s571 = smul.addr %s570, 2
          %s572 = smul.addr %s571, 8
          %s573 = scalar_lea.vmem %s0, %s572
          %s574 = smul.u32 2, %s36
        $region16: #{tpu_custom_call.1} parent=11 // pred_fallthru
          _
        // Predicated region
        $region17: #{tpu_custom_call.1} parent=11 // pred_check
          %p575 = pneg %p86
        $region18: #{tpu_custom_call.1} parent=11 // pred_check_branch
          %577 = sbr.rel (%p575) target = $region20
        $region19: #{tpu_custom_call.1} parent=11 // pred_region
          _
        $region20: #{tpu_custom_call.1} parent=11 // pred_fallthru
          _
        // Predicated region
        $region21: #{tpu_custom_call.1} parent=11 // pred_check
          %p578 = pneg %p107
        $region22: #{tpu_custom_call.1} parent=11 // pred_check_branch
          %580 = sbr.rel (%p578) target = $region24
        $region23: #{tpu_custom_call.1} parent=11 // pred_region
          _
        $region24: #{tpu_custom_call.1} parent=11 // pred_fallthru
          _
        // Predicated region
        $region25: #{tpu_custom_call.1} parent=11 // pred_check
          %p581 = pneg %p128
        $region26: #{tpu_custom_call.1} parent=11 // pred_check_branch
          %583 = sbr.rel (%p581) target = $region28
        $region27: #{tpu_custom_call.1} parent=11 // pred_region
          _
        $region28: #{tpu_custom_call.1} parent=11 // pred_fallthru
          _
        // Predicated region
        $region29: #{tpu_custom_call.1} parent=11 // pred_check
          %p584 = pneg %p149
        $region30: #{tpu_custom_call.1} parent=11 // pred_check_branch
          %586 = sbr.rel (%p584) target = $region32
        $region31: #{tpu_custom_call.1} parent=11 // pred_region
          _
        $region32: #{tpu_custom_call.1} parent=11 // pred_fallthru
          _
        // Predicated region
        $region33: #{tpu_custom_call.1} parent=11 // pred_check
          %p587 = pneg %p482
        $region34: #{tpu_custom_call.1} parent=11 // pred_check_branch
          %589 = sbr.rel (%p587) target = $region36
        $region35: #{tpu_custom_call.1} parent=11 // pred_region
          _
        $region36: #{tpu_custom_call.1} parent=11 // pred_fallthru
          _
        // Predicated region
        $region37: #{tpu_custom_call.1} parent=11 // pred_check
          %p590 = pneg %p503
        $region38: #{tpu_custom_call.1} parent=11 // pred_check_branch
          %592 = sbr.rel (%p590) target = $region40
        $region39: #{tpu_custom_call.1} parent=11 // pred_region
          _
        $region40: #{tpu_custom_call.1} parent=11 // pred_fallthru
          _
        // Predicated region
        $region41: #{tpu_custom_call.1} parent=11 // pred_check
          %p593 = pneg %p524
        $region42: #{tpu_custom_call.1} parent=11 // pred_check_branch
          %595 = sbr.rel (%p593) target = $region44
        $region43: #{tpu_custom_call.1} parent=11 // pred_region
          _
        $region44: #{tpu_custom_call.1} parent=11 // pred_fallthru
          _
      $region12: #{tpu_custom_call.1} parent=5 // pred_fallthru
        _
      %p596 = scmp.lt.s32.totalorder %s27, 2
      // Predicated region
      $region45: #{tpu_custom_call.1} parent=5 // pred_check
        %p597 = pneg %p596
      $region46: #{tpu_custom_call.1} parent=5 // pred_check_branch
        %599 = sbr.rel (%p597) target = $region48
      $region47: #{tpu_custom_call.1} parent=5 // pred_region
        // Predicated region
        $region49: #{tpu_custom_call.1} parent=47 // pred_check
          %p600 = pneg %p169
        $region50: #{tpu_custom_call.1} parent=47 // pred_check_branch
          %602 = sbr.rel (%p600) target = $region52
        $region51: #{tpu_custom_call.1} parent=47 // pred_region
          %p603 = scmp.lt.s32.totalorder %s35, 1
          %s604 = scalar_select %p603, %s35, 1
          %s605 = scalar_lea.vmem %s5, %s604
        $region52: #{tpu_custom_call.1} parent=47 // pred_fallthru
          _
        // Predicated region
        $region53: #{tpu_custom_call.1} parent=47 // pred_check
          %p606 = pneg %p195
        $region54: #{tpu_custom_call.1} parent=47 // pred_check_branch
          %608 = sbr.rel (%p606) target = $region56
        $region55: #{tpu_custom_call.1} parent=47 // pred_region
          %p609 = scmp.lt.s32.totalorder %s35, 1
          %s610 = scalar_select %p609, %s35, 1
          %s611 = scalar_lea.vmem %s6, %s610
        $region56: #{tpu_custom_call.1} parent=47 // pred_fallthru
          _
        // Predicated region
        $region57: #{tpu_custom_call.1} parent=47 // pred_check
          %p612 = pneg %p221
        $region58: #{tpu_custom_call.1} parent=47 // pred_check_branch
          %614 = sbr.rel (%p612) target = $region60
        $region59: #{tpu_custom_call.1} parent=47 // pred_region
          %p615 = scmp.lt.s32.totalorder %s35, 1
          %s616 = scalar_select %p615, %s35, 1
          %s617 = smul.addr %s616, 4
          %s618 = smul.addr %s617, 4
          %s619 = scalar_lea.vmem %s7, %s618
        $region60: #{tpu_custom_call.1} parent=47 // pred_fallthru
          _
        // Predicated region
        $region61: #{tpu_custom_call.1} parent=47 // pred_check
          %p620 = pneg %p247
        $region62: #{tpu_custom_call.1} parent=47 // pred_check_branch
          %622 = sbr.rel (%p620) target = $region64
        $region63: #{tpu_custom_call.1} parent=47 // pred_region
          %p623 = scmp.lt.s32.totalorder %s35, 1
          %s624 = scalar_select %p623, %s35, 1
          %s625 = scalar_lea.vmem %s8, %s624
        $region64: #{tpu_custom_call.1} parent=47 // pred_fallthru
          _
        // Predicated region
        $region65: #{tpu_custom_call.1} parent=47 // pred_check
          %p626 = pneg %p273
        $region66: #{tpu_custom_call.1} parent=47 // pred_check_branch
          %628 = sbr.rel (%p626) target = $region68
        $region67: #{tpu_custom_call.1} parent=47 // pred_region
          %p629 = scmp.lt.s32.totalorder %s35, 1
          %s630 = scalar_select %p629, %s35, 1
          %s631 = smul.addr %s630, 4
          %s632 = smul.addr %s631, 4
          %s633 = scalar_lea.vmem %s9, %s632
        $region68: #{tpu_custom_call.1} parent=47 // pred_fallthru
          _
        // Predicated region
        $region69: #{tpu_custom_call.1} parent=47 // pred_check
          %p634 = pneg %p299
        $region70: #{tpu_custom_call.1} parent=47 // pred_check_branch
          %636 = sbr.rel (%p634) target = $region72
        $region71: #{tpu_custom_call.1} parent=47 // pred_region
          %p637 = scmp.lt.s32.totalorder %s35, 1
          %s638 = scalar_select %p637, %s35, 1
          %s639 = scalar_lea.vmem %s10, %s638
        $region72: #{tpu_custom_call.1} parent=47 // pred_fallthru
          _
        // Predicated region
        $region73: #{tpu_custom_call.1} parent=47 // pred_check
          %p640 = pneg %p325
        $region74: #{tpu_custom_call.1} parent=47 // pred_check_branch
          %642 = sbr.rel (%p640) target = $region76
        $region75: #{tpu_custom_call.1} parent=47 // pred_region
          %p643 = scmp.lt.s32.totalorder %s35, 1
          %s644 = scalar_select %p643, %s35, 1
          %s645 = scalar_lea.vmem %s11, %s644
        $region76: #{tpu_custom_call.1} parent=47 // pred_fallthru
          _
        // Predicated region
        $region77: #{tpu_custom_call.1} parent=47 // pred_check
          %p646 = pneg %p351
        $region78: #{tpu_custom_call.1} parent=47 // pred_check_branch
          %648 = sbr.rel (%p646) target = $region80
        $region79: #{tpu_custom_call.1} parent=47 // pred_region
          %p649 = scmp.lt.s32.totalorder %s35, 1
          %s650 = scalar_select %p649, %s35, 1
          %s651 = scalar_lea.vmem %s12, %s650
        $region80: #{tpu_custom_call.1} parent=47 // pred_fallthru
          _
        // Predicated region
        $region81: #{tpu_custom_call.1} parent=47 // pred_check
          %p652 = pneg %p377
        $region82: #{tpu_custom_call.1} parent=47 // pred_check_branch
          %654 = sbr.rel (%p652) target = $region84
        $region83: #{tpu_custom_call.1} parent=47 // pred_region
          %p655 = scmp.lt.s32.totalorder %s35, 1
          %s656 = scalar_select %p655, %s35, 1
          %s657 = smul.addr %s656, 4
          %s658 = smul.addr %s657, 4
          %s659 = scalar_lea.vmem %s13, %s658
        $region84: #{tpu_custom_call.1} parent=47 // pred_fallthru
          _
        // Predicated region
        $region85: #{tpu_custom_call.1} parent=47 // pred_check
          %p660 = pneg %p403
        $region86: #{tpu_custom_call.1} parent=47 // pred_check_branch
          %662 = sbr.rel (%p660) target = $region88
        $region87: #{tpu_custom_call.1} parent=47 // pred_region
          %p663 = scmp.lt.s32.totalorder %s35, 1
          %s664 = scalar_select %p663, %s35, 1
          %s665 = scalar_lea.vmem %s14, %s664
        $region88: #{tpu_custom_call.1} parent=47 // pred_fallthru
          _
        // Predicated region
        $region89: #{tpu_custom_call.1} parent=47 // pred_check
          %p666 = pneg %p429
        $region90: #{tpu_custom_call.1} parent=47 // pred_check_branch
          %668 = sbr.rel (%p666) target = $region92
        $region91: #{tpu_custom_call.1} parent=47 // pred_region
          %p669 = scmp.lt.s32.totalorder %s35, 1
          %s670 = scalar_select %p669, %s35, 1
          %s671 = smul.addr %s670, 16
          %s672 = smul.addr %s671, 4
          %s673 = scalar_lea.vmem %s15, %s672
        $region92: #{tpu_custom_call.1} parent=47 // pred_fallthru
          _
        // Predicated region
        $region93: #{tpu_custom_call.1} parent=47 // pred_check
          %p674 = pneg %p455
        $region94: #{tpu_custom_call.1} parent=47 // pred_check_branch
          %676 = sbr.rel (%p674) target = $region96
        $region95: #{tpu_custom_call.1} parent=47 // pred_region
          %p677 = scmp.lt.s32.totalorder %s35, 1
          %s678 = scalar_select %p677, %s35, 1
          %s679 = scalar_lea.vmem %s16, %s678
        $region96: #{tpu_custom_call.1} parent=47 // pred_fallthru
          _
      $region48: #{tpu_custom_call.1} parent=5 // pred_fallthru
        _
      %p680 = scmp.le.s32.totalorder 1, %s27
      %p681 = scmp.lt.s32.totalorder %s27, 3
      %p682 = pnand %p680, %p681
      %p683 = pneg %p682
      // Predicated region
      $region97: #{tpu_custom_call.1} parent=5 // pred_check
        _
      $region98: #{tpu_custom_call.1} parent=5 // pred_check_branch
        %685 = sbr.rel (%p682) target = $region100
      $region99: #{tpu_custom_call.1} parent=5 // pred_region
        %s686 = ssub.s32 %s27, 1
        %s687 = smul.u32 2, %s36
        %p688 = scmp.lt.s32.totalorder %s687, 1
        %s689 = scalar_select %p688, %s687, 1
        %s690 = smul.addr %s689, 2
        %s691 = smul.addr %s690, 8
        %s692 = scalar_lea.vmem %s0, %s691
        %p693 = pneg %p65
        %p694 = pneg %p62
        %p695 = pneg %p86
        %p696 = pneg %p83
        %p697 = pneg %p107
        %p698 = pneg %p104
        %p699 = pneg %p128
        %p700 = pneg %p125
        %p701 = pneg %p149
        %p702 = pneg %p146
        %p703 = scmp.lt.s32.totalorder %s37, 1
        %s704 = scalar_select %p703, %s37, 1
        %s705 = scalar_lea.vmem %s5, %s704
        %p706 = pneg %p175
        %p707 = pneg %p172
        %p708 = scmp.lt.s32.totalorder %s37, 1
        %s709 = scalar_select %p708, %s37, 1
        %s710 = scalar_lea.vmem %s6, %s709
        %p711 = pneg %p201
        %p712 = pneg %p198
        %p713 = scmp.lt.s32.totalorder %s37, 1
        %s714 = scalar_select %p713, %s37, 1
        %s715 = smul.addr %s714, 4
        %s716 = smul.addr %s715, 4
        %s717 = scalar_lea.vmem %s7, %s716
        %p718 = pneg %p227
        %p719 = pneg %p224
        %p720 = scmp.lt.s32.totalorder %s37, 1
        %s721 = scalar_select %p720, %s37, 1
        %s722 = scalar_lea.vmem %s8, %s721
        %p723 = pneg %p253
        %p724 = pneg %p250
        %p725 = scmp.lt.s32.totalorder %s37, 1
        %s726 = scalar_select %p725, %s37, 1
        %s727 = smul.addr %s726, 4
        %s728 = smul.addr %s727, 4
        %s729 = scalar_lea.vmem %s9, %s728
        %p730 = pneg %p279
        %p731 = pneg %p276
        %p732 = scmp.lt.s32.totalorder %s37, 1
        %s733 = scalar_select %p732, %s37, 1
        %s734 = scalar_lea.vmem %s10, %s733
        %p735 = pneg %p305
        %p736 = pneg %p302
        %p737 = scmp.lt.s32.totalorder %s37, 1
        %s738 = scalar_select %p737, %s37, 1
        %s739 = scalar_lea.vmem %s11, %s738
        %p740 = pneg %p331
        %p741 = pneg %p328
        %p742 = scmp.lt.s32.totalorder %s37, 1
        %s743 = scalar_select %p742, %s37, 1
        %s744 = scalar_lea.vmem %s12, %s743
        %p745 = pneg %p357
        %p746 = pneg %p354
        %p747 = scmp.lt.s32.totalorder %s37, 1
        %s748 = scalar_select %p747, %s37, 1
        %s749 = smul.addr %s748, 4
        %s750 = smul.addr %s749, 4
        %s751 = scalar_lea.vmem %s13, %s750
        %p752 = pneg %p383
        %p753 = pneg %p380
        %p754 = scmp.lt.s32.totalorder %s37, 1
        %s755 = scalar_select %p754, %s37, 1
        %s756 = scalar_lea.vmem %s14, %s755
        %p757 = pneg %p409
        %p758 = pneg %p406
        %p759 = scmp.lt.s32.totalorder %s37, 1
        %s760 = scalar_select %p759, %s37, 1
        %s761 = smul.addr %s760, 16
        %s762 = smul.addr %s761, 4
        %s763 = scalar_lea.vmem %s15, %s762
        %p764 = pneg %p435
        %p765 = pneg %p432
        %p766 = scmp.lt.s32.totalorder %s37, 1
        %s767 = scalar_select %p766, %s37, 1
        %s768 = scalar_lea.vmem %s16, %s767
        %p769 = pneg %p461
        %p770 = pneg %p458
        %p771 = pneg %p482
        %p772 = pneg %p479
        %p773 = pneg %p503
        %p774 = pneg %p500
        %p775 = pneg %p524
        %p776 = pneg %p521
        %p777 = pneg %p550
        %p778 = pneg %p547
        %s779 = smul.u32 2, %s36
        %p780 = scmp.lt.s32.totalorder %s779, 1
        %s781 = scalar_select %p780, %s779, 1
        %s782 = smul.addr %s781, 2
        %s783 = smul.addr %s782, 8
        %s784 = scalar_lea.vmem %s0, %s783
        %s785 = smul.u32 2, %s36
        %p786 = scmp.lt.s32.totalorder %s37, 1
        %s787 = scalar_select %p786, %s37, 1
        %s788 = scalar_lea.vmem %s5, %s787
        %p789 = scmp.lt.s32.totalorder %s37, 1
        %s790 = scalar_select %p789, %s37, 1
        %s791 = scalar_lea.vmem %s6, %s790
        %p792 = scmp.lt.s32.totalorder %s37, 1
        %s793 = scalar_select %p792, %s37, 1
        %s794 = smul.addr %s793, 4
        %s795 = smul.addr %s794, 4
        %s796 = scalar_lea.vmem %s7, %s795
        %p797 = scmp.lt.s32.totalorder %s37, 1
        %s798 = scalar_select %p797, %s37, 1
        %s799 = scalar_lea.vmem %s8, %s798
        %p800 = scmp.lt.s32.totalorder %s37, 1
        %s801 = scalar_select %p800, %s37, 1
        %s802 = smul.addr %s801, 4
        %s803 = smul.addr %s802, 4
        %s804 = scalar_lea.vmem %s9, %s803
        %p805 = scmp.lt.s32.totalorder %s37, 1
        %s806 = scalar_select %p805, %s37, 1
        %s807 = scalar_lea.vmem %s10, %s806
        %p808 = scmp.lt.s32.totalorder %s37, 1
        %s809 = scalar_select %p808, %s37, 1
        %s810 = scalar_lea.vmem %s11, %s809
        %p811 = scmp.lt.s32.totalorder %s37, 1
        %s812 = scalar_select %p811, %s37, 1
        %s813 = scalar_lea.vmem %s12, %s812
        %p814 = scmp.lt.s32.totalorder %s37, 1
        %s815 = scalar_select %p814, %s37, 1
        %s816 = smul.addr %s815, 4
        %s817 = smul.addr %s816, 4
        %s818 = scalar_lea.vmem %s13, %s817
        %p819 = scmp.lt.s32.totalorder %s37, 1
        %s820 = scalar_select %p819, %s37, 1
        %s821 = scalar_lea.vmem %s14, %s820
        %p822 = scmp.lt.s32.totalorder %s37, 1
        %s823 = scalar_select %p822, %s37, 1
        %s824 = smul.addr %s823, 16
        %s825 = smul.addr %s824, 4
        %s826 = scalar_lea.vmem %s15, %s825
        %p827 = scmp.lt.s32.totalorder %s37, 1
        %s828 = scalar_select %p827, %s37, 1
        %s829 = scalar_lea.vmem %s16, %s828
        %p831 = scmp.eq.s32.totalorder %s37, 0
        // Predicated region
        $region101: #{tpu_custom_call.1} parent=99 // pred_check
          %p832 = pneg %p831
        $region102: #{tpu_custom_call.1} parent=99 // pred_check_branch
          %834 = sbr.rel (%p832) target = $region104
        $region103: #{tpu_custom_call.1} parent=99 // pred_region
          %v835 = vld [vmem:[%s784] sm:$0x1f]
          %v836 = vld [vmem:[%s784 + $0x8] sm:$0x1f]
          %v837 = vld [vmem:[%s784 + $0x10] sm:$0x1f]
          %v838 = vld [vmem:[%s784 + $0x18] sm:$0x1f]
          %v843 = vrot.slane %v836, 7
          %v844 = vrot.slane %v838, 7
          %vm845 = vcmask 1040384
          %v846 = vsel %vm845, %v835, %v843
          %vm847 = vcmask 1041409
          %v848 = vsel %vm847, %v835, %v843
          %v849 = vrot.slane %v848, 1
          %vm850 = vcmask 1042434
          %v851 = vsel %vm850, %v835, %v843
          %v852 = vrot.slane %v851, 2
          %vm853 = vcmask 1043459
          %v854 = vsel %vm853, %v835, %v843
          %v855 = vrot.slane %v854, 3
          %vm856 = vcmask 1044484
          %v857 = vsel %vm856, %v835, %v843
          %v858 = vrot.slane %v857, 4
          %v859 = vsel %vm845, %v837, %v844
          %v860 = vsel %vm847, %v837, %v844
          %v861 = vrot.slane %v860, 1
          %v862 = vsel %vm850, %v837, %v844
          %v863 = vrot.slane %v862, 2
          %v864 = vsel %vm853, %v837, %v844
          %v865 = vrot.slane %v864, 3
          %v866 = vsel %vm856, %v837, %v844
          %v867 = vrot.slane %v866, 4
          %v868 = vld [vmem:[%s1] sm:$0xf]
          %v869 = vld [vmem:[%s1 + $0x4] sm:$0xf]
          %v870 = vld [vmem:[%s1 + $0x8] sm:$0xf]
          %v871 = vld [vmem:[%s1 + $0xc] sm:$0xf]
          %v872 = vld [vmem:[%s1 + $0x10] sm:$0xf]
          %v873 = vld [vmem:[%s1 + $0x14] sm:$0xf]
          %v874 = vld [vmem:[%s1 + $0x18] sm:$0xf]
          %v875 = vld [vmem:[%s1 + $0x1c] sm:$0xf]
          %v876 = vld [vmem:[%s1 + $0x20] sm:$0xf]
          %v877 = vld [vmem:[%s1 + $0x24] sm:$0xf]
          %v878 = vld [vmem:[%s1 + $0x28] sm:$0xf]
          %v879 = vld [vmem:[%s1 + $0x2c] sm:$0xf]
          %v880 = vld [vmem:[%s1 + $0x30] sm:$0xf]
          %v881 = vld [vmem:[%s1 + $0x34] sm:$0xf]
          %v882 = vld [vmem:[%s1 + $0x38] sm:$0xf]
          %v883 = vld [vmem:[%s1 + $0x3c] sm:$0xf]
          %v884 = vld [vmem:[%s1 + $0x40] sm:$0xf]
          %v885 = vld [vmem:[%s1 + $0x44] sm:$0xf]
          %v886 = vld [vmem:[%s1 + $0x48] sm:$0xf]
          %v887 = vld [vmem:[%s1 + $0x4c] sm:$0xf]
          %v888 = vld [vmem:[%s1 + $0x50] sm:$0xf]
          %v889 = vld [vmem:[%s1 + $0x54] sm:$0xf]
          %v890 = vld [vmem:[%s1 + $0x58] sm:$0xf]
          %v891 = vld [vmem:[%s1 + $0x5c] sm:$0xf]
          %892 = vst [vmem:[#allocation1] ss:$9 sm:$0xff] %v846
          %s893 = scalar_lea.vmem [#allocation1], 1
          %894 = vst [vmem:[%s893] ss:$9 sm:$0xff] %v849
          %s895 = scalar_lea.vmem [#allocation1], 2
          %896 = vst [vmem:[%s895] ss:$9 sm:$0xff] %v852
          %s897 = scalar_lea.vmem [#allocation1], 3
          %898 = vst [vmem:[%s897] ss:$9 sm:$0xff] %v855
          %s899 = scalar_lea.vmem [#allocation1], 4
          %900 = vst [vmem:[%s899] ss:$9 sm:$0xff] %v858
          %s901 = scalar_lea.vmem [#allocation1], 5
          %902 = vst [vmem:[%s901] ss:$9 sm:$0xff] %v859
          %s903 = scalar_lea.vmem [#allocation1], 6
          %904 = vst [vmem:[%s903] ss:$9 sm:$0xff] %v861
          %s905 = scalar_lea.vmem [#allocation1], 7
          %906 = vst [vmem:[%s905] ss:$9 sm:$0xff] %v863
          %v907 = vld [vmem:[#allocation1] sm:$0xff]
          %v908 = vld [vmem:[#allocation1 + $0x9] sm:$0xff]
          %909 = vst [vmem:[#allocation1] ss:$9 sm:$0xff] %v865
          %910 = vst [vmem:[%s893] ss:$9 sm:$0xff] %v867
          %v911 = vld [vmem:[#allocation1] sm:$0xff]
          %v912 = vld [vmem:[#allocation1 + $0x9] sm:$0xff]
          %v917 = vpack.c.bf16 %v911, %v907
          %v918 = vpack.c.bf16 %v912, %v908
          %v943 = vunpack.c.l.b16 %v868
          %v944 = vunpack.c.l.b16 %v869
          %v945 = vunpack.c.l.b16 %v870
          %v946 = vunpack.c.l.b16 %v871
          %v947 = vunpack.c.l.b16 %v872
          %v948 = vunpack.c.l.b16 %v873
          %v949 = vunpack.c.l.b16 %v874
          %v950 = vunpack.c.l.b16 %v875
          %v951 = vunpack.c.l.b16 %v876
          %v952 = vunpack.c.l.b16 %v877
          %v953 = vunpack.c.l.b16 %v878
          %v954 = vunpack.c.l.b16 %v879
          %v955 = vunpack.c.l.b16 %v880
          %v956 = vunpack.c.l.b16 %v881
          %v957 = vunpack.c.l.b16 %v882
          %v958 = vunpack.c.l.b16 %v883
          %v959 = vunpack.c.l.b16 %v884
          %v960 = vunpack.c.l.b16 %v885
          %v961 = vunpack.c.l.b16 %v886
          %v962 = vunpack.c.l.b16 %v887
          %v963 = vunpack.c.l.b16 %v888
          %v964 = vunpack.c.l.b16 %v889
          %v965 = vunpack.c.l.b16 %v890
          %v966 = vunpack.c.l.b16 %v891
          %v967 = vpack.c.b16 %v944, %v943
          %v968 = vpack.c.b16 %v946, %v945
          %v969 = vpack.c.b16 %v948, %v947
          %v970 = vpack.c.b16 %v950, %v949
          %v971 = vpack.c.b16 %v952, %v951
          %v972 = vpack.c.b16 %v954, %v953
          %v973 = vpack.c.b16 %v956, %v955
          %v974 = vpack.c.b16 %v958, %v957
          %v975 = vpack.c.b16 %v960, %v959
          %v976 = vpack.c.b16 %v962, %v961
          %v977 = vpack.c.b16 %v964, %v963
          %v978 = vpack.c.b16 %v966, %v965
          %vm991 = vcmask 523264
          %v993 = vsel %vm991, %v918, 0
          %995 = vmatpush.bf16.msra.mxu0 %v974
          %996 = vmatpush.bf16.msra.mxu0 %v973
          %997 = vmatpush.bf16.msra.mxu0 %v972
          %998 = vmatpush.bf16.msra.mxu0 %v971
          %999 = vmatpush.bf16.msra.mxu0 %v970
          %1000 = vmatpush.bf16.msra.mxu0 %v969
          %1001 = vmatpush.bf16.msra.mxu0 %v968
          %1002 = vmatpush.bf16.msra.mxu0 %v967
          %1003 = vmatmul.bf16.gmra.mxu0 %v917
          %v1004 = vpop.f32.mrf.mxu0
          %v1005 = vadd.f32 0.0, %v1004
          %v1006 = vpop.f32.mrf.mxu0
          %v1007 = vadd.f32 0.0, %v1006
          %1008 = vdwg.mxu0
          %1009 = vmatpush.bf16.msra.mxu0 0
          %1010 = vmatpush.bf16.msra.mxu0 0
          %1011 = vmatpush.bf16.msra.mxu0 0
          %1012 = vmatpush.bf16.msra.mxu0 0
          %1013 = vmatpush.bf16.msra.mxu0 %v978
          %1014 = vmatpush.bf16.msra.mxu0 %v977
          %1015 = vmatpush.bf16.msra.mxu0 %v976
          %1016 = vmatpush.bf16.msra.mxu0 %v975
          %1017 = vmatmul.bf16.gmra.mxu0 %v993
          %v1018 = vpop.f32.mrf.mxu0
          %v1019 = vadd.f32 %v1005, %v1018
          %v1020 = vpop.f32.mrf.mxu0
          %v1021 = vadd.f32 %v1007, %v1020
          %1022 = vdwg.mxu0
          %v1025 = vrot.slane %v1019, 1
          %v1026 = vrot.slane %v1019, 2
          %v1027 = vrot.slane %v1019, 3
          %v1028 = vrot.slane %v1019, 4
          %v1029 = vrot.slane %v1019, 5
          %v1030 = vrot.slane %v1019, 6
          %v1031 = vrot.slane %v1019, 7
          %v1032 = vrot.slane %v1021, 1
          %v1041 = vld [vmem:[%s2] sm:$0x1f]
          %v1043 = vrot.slane %v1041, 1
          %v1044 = vrot.slane %v1041, 2
          %v1045 = vrot.slane %v1041, 3
          %v1046 = vrot.slane %v1041, 4
          %v1051 = vadd.f32 %v1019, %v1041
          %v1052 = vadd.f32 %v1025, %v1043
          %v1053 = vadd.f32 %v1026, %v1044
          %v1054 = vadd.f32 %v1027, %v1045
          %v1055 = vadd.f32 %v1028, %v1046
          %v1056 = vadd.f32 %v1029, %v1041
          %v1057 = vadd.f32 %v1030, %v1043
          %v1058 = vadd.f32 %v1031, %v1044
          %v1059 = vadd.f32 %v1021, %v1045
          %v1060 = vadd.f32 %v1032, %v1046
          %v1061 = vld [vmem:[%s3] sm:$0x1]
          %v1062 = vld [vmem:[%s4] sm:$0x1]
          %1073 = vst [vmem:[#allocation1] ss:$9 sm:$0xff] %v1051
          %s1074 = scalar_lea.vmem [#allocation1], 1
          %1075 = vst [vmem:[%s1074] ss:$9 sm:$0xff] %v1052
          %s1076 = scalar_lea.vmem [#allocation1], 2
          %1077 = vst [vmem:[%s1076] ss:$9 sm:$0xff] %v1053
          %s1078 = scalar_lea.vmem [#allocation1], 3
          %1079 = vst [vmem:[%s1078] ss:$9 sm:$0xff] %v1054
          %s1080 = scalar_lea.vmem [#allocation1], 4
          %1081 = vst [vmem:[%s1080] ss:$9 sm:$0xff] %v1055
          %v1082 = vld [vmem:[#allocation1] sm:$0xff]
          %1083 = vst [vmem:[#allocation1] ss:$9 sm:$0xff] %v1056
          %1084 = vst [vmem:[%s1074] ss:$9 sm:$0xff] %v1057
          %1085 = vst [vmem:[%s1076] ss:$9 sm:$0xff] %v1058
          %1086 = vst [vmem:[%s1078] ss:$9 sm:$0xff] %v1059
          %1087 = vst [vmem:[%s1080] ss:$9 sm:$0xff] %v1060
          %v1088 = vld [vmem:[#allocation1] sm:$0xff]
          %vm1091 = vcmask 258048
          %v1092 = vsel %vm1091, %v1082, 0.0
          %1093 = vadd.xlane.f32.xlu0 %v1092
          %v1094 = vpop.xlane.xlu0 %1093
          %v1095 = vsel %vm1091, %v1088, 0.0
          %1096 = vadd.xlane.f32.xlu0 %v1095
          %v1097 = vpop.xlane.xlu0 %1096
          %v1098 = vrcp.pop 32.0
          %v1099 = vmul.f32 32.0, %v1098
          %v1100 = vsub.f32 1.0, %v1099
          %v1101 = vmul.f32 %v1098, %v1100
          %v1102 = vadd.f32 %v1098, %v1101
          %vm1103 = vweird.f32 %v1098
          %v1104 = vsel %vm1103, %v1098, %v1102
          %v1105 = vmul.f32 %v1094, %v1104
          %v1106 = vmul.f32 %v1097, %v1104
          %v1109 = vperm.slane %v1105, 0
          %v1110 = vperm.slane %v1105, 1
          %v1111 = vperm.slane %v1105, 2
          %v1112 = vperm.slane %v1105, 3
          %v1113 = vperm.slane %v1105, 4
          %v1114 = vperm.slane %v1106, 0
          %v1115 = vperm.slane %v1106, 1
          %v1116 = vperm.slane %v1106, 2
          %v1117 = vperm.slane %v1106, 3
          %v1118 = vperm.slane %v1106, 4
          %v1129 = vsub.f32 %v1051, %v1109
          %v1130 = vsub.f32 %v1052, %v1110
          %v1131 = vsub.f32 %v1053, %v1111
          %v1132 = vsub.f32 %v1054, %v1112
          %v1133 = vsub.f32 %v1055, %v1113
          %v1134 = vsub.f32 %v1056, %v1114
          %v1135 = vsub.f32 %v1057, %v1115
          %v1136 = vsub.f32 %v1058, %v1116
          %v1137 = vsub.f32 %v1059, %v1117
          %v1138 = vsub.f32 %v1060, %v1118
          %v1139 = vmul.f32 %v1129, %v1129
          %v1140 = vmul.f32 %v1130, %v1130
          %v1141 = vmul.f32 %v1131, %v1131
          %v1142 = vmul.f32 %v1132, %v1132
          %v1143 = vmul.f32 %v1133, %v1133
          %v1144 = vmul.f32 %v1134, %v1134
          %v1145 = vmul.f32 %v1135, %v1135
          %v1146 = vmul.f32 %v1136, %v1136
          %v1147 = vmul.f32 %v1137, %v1137
          %v1148 = vmul.f32 %v1138, %v1138
          %1159 = vst [vmem:[#allocation1] ss:$9 sm:$0xff] %v1139
          %s1160 = scalar_lea.vmem [#allocation1], 1
          %1161 = vst [vmem:[%s1160] ss:$9 sm:$0xff] %v1140
          %s1162 = scalar_lea.vmem [#allocation1], 2
          %1163 = vst [vmem:[%s1162] ss:$9 sm:$0xff] %v1141
          %s1164 = scalar_lea.vmem [#allocation1], 3
          %1165 = vst [vmem:[%s1164] ss:$9 sm:$0xff] %v1142
          %s1166 = scalar_lea.vmem [#allocation1], 4
          %1167 = vst [vmem:[%s1166] ss:$9 sm:$0xff] %v1143
          %v1168 = vld [vmem:[#allocation1] sm:$0xff]
          %1169 = vst [vmem:[#allocation1] ss:$9 sm:$0xff] %v1144
          %1170 = vst [vmem:[%s1160] ss:$9 sm:$0xff] %v1145
          %1171 = vst [vmem:[%s1162] ss:$9 sm:$0xff] %v1146
          %1172 = vst [vmem:[%s1164] ss:$9 sm:$0xff] %v1147
          %1173 = vst [vmem:[%s1166] ss:$9 sm:$0xff] %v1148
          %v1174 = vld [vmem:[#allocation1] sm:$0xff]
          %v1177 = vsel %vm1091, %v1168, 0.0
          %1178 = vadd.xlane.f32.xlu0 %v1177
          %v1179 = vpop.xlane.xlu0 %1178
          %v1180 = vsel %vm1091, %v1174, 0.0
          %1181 = vadd.xlane.f32.xlu0 %v1180
          %v1182 = vpop.xlane.xlu0 %1181
          %v1183 = vmul.f32 %v1179, %v1104
          %v1184 = vmul.f32 %v1182, %v1104
          %v1185 = vadd.f32 %v1183, 1e-05
          %v1186 = vadd.f32 %v1184, 1e-05
          %v1187 = vrsqrt.pop %v1185
          %v1188 = vmul.f32 %v1187, %v1185
          %v1189 = vmul.f32 %v1188, %v1187
          %v1190 = vmul.f32 0.5, %v1189
          %v1191 = vsub.f32 1.5, %v1190
          %v1192 = vmul.f32 %v1187, %v1191
          %vm1193 = vweird.f32 %v1185
          %vm1194 = vweird.f32 %v1187
          %vm1195 = vmor %vm1193, %vm1194
          %v1196 = vsel %vm1195, %v1187, %v1192
          %v1197 = vrsqrt.pop %v1186
          %v1198 = vmul.f32 %v1197, %v1186
          %v1199 = vmul.f32 %v1198, %v1197
          %v1200 = vmul.f32 0.5, %v1199
          %v1201 = vsub.f32 1.5, %v1200
          %v1202 = vmul.f32 %v1197, %v1201
          %vm1203 = vweird.f32 %v1186
          %vm1204 = vweird.f32 %v1197
          %vm1205 = vmor %vm1203, %vm1204
          %v1206 = vsel %vm1205, %v1197, %v1202
          %v1209 = vperm.slane %v1196, 0
          %v1210 = vperm.slane %v1196, 1
          %v1211 = vperm.slane %v1196, 2
          %v1212 = vperm.slane %v1196, 3
          %v1213 = vperm.slane %v1196, 4
          %v1214 = vperm.slane %v1206, 0
          %v1215 = vperm.slane %v1206, 1
          %v1216 = vperm.slane %v1206, 2
          %v1217 = vperm.slane %v1206, 3
          %v1218 = vperm.slane %v1206, 4
          %v1229 = vmul.f32 %v1129, %v1209
          %v1230 = vmul.f32 %v1130, %v1210
          %v1231 = vmul.f32 %v1131, %v1211
          %v1232 = vmul.f32 %v1132, %v1212
          %v1233 = vmul.f32 %v1133, %v1213
          %v1234 = vmul.f32 %v1134, %v1214
          %v1235 = vmul.f32 %v1135, %v1215
          %v1236 = vmul.f32 %v1136, %v1216
          %v1237 = vmul.f32 %v1137, %v1217
          %v1238 = vmul.f32 %v1138, %v1218
          %v1240 = vperm.slane %v1061, 0
          %v1242 = vrot.slane %v1240, 1
          %v1243 = vrot.slane %v1240, 2
          %v1244 = vrot.slane %v1240, 3
          %v1245 = vrot.slane %v1240, 4
          %v1250 = vmul.f32 %v1229, %v1240
          %v1251 = vmul.f32 %v1230, %v1242
          %v1252 = vmul.f32 %v1231, %v1243
          %v1253 = vmul.f32 %v1232, %v1244
          %v1254 = vmul.f32 %v1233, %v1245
          %v1255 = vmul.f32 %v1234, %v1240
          %v1256 = vmul.f32 %v1235, %v1242
          %v1257 = vmul.f32 %v1236, %v1243
          %v1258 = vmul.f32 %v1237, %v1244
          %v1259 = vmul.f32 %v1238, %v1245
          %v1261 = vperm.slane %v1062, 0
          %v1263 = vrot.slane %v1261, 1
          %v1264 = vrot.slane %v1261, 2
          %v1265 = vrot.slane %v1261, 3
          %v1266 = vrot.slane %v1261, 4
          %v1271 = vadd.f32 %v1250, %v1261
          %v1272 = vadd.f32 %v1251, %v1263
          %v1273 = vadd.f32 %v1252, %v1264
          %v1274 = vadd.f32 %v1253, %v1265
          %v1275 = vadd.f32 %v1254, %v1266
          %v1276 = vadd.f32 %v1255, %v1261
          %v1277 = vadd.f32 %v1256, %v1263
          %v1278 = vadd.f32 %v1257, %v1264
          %v1279 = vadd.f32 %v1258, %v1265
          %v1280 = vadd.f32 %v1259, %v1266
          %1291 = vst [vmem:[#allocation1] ss:$9 sm:$0xff] %v1271
          %s1292 = scalar_lea.vmem [#allocation1], 1
          %1293 = vst [vmem:[%s1292] ss:$9 sm:$0xff] %v1272
          %s1294 = scalar_lea.vmem [#allocation1], 2
          %1295 = vst [vmem:[%s1294] ss:$9 sm:$0xff] %v1273
          %s1296 = scalar_lea.vmem [#allocation1], 3
          %1297 = vst [vmem:[%s1296] ss:$9 sm:$0xff] %v1274
          %s1298 = scalar_lea.vmem [#allocation1], 4
          %1299 = vst [vmem:[%s1298] ss:$9 sm:$0xff] %v1275
          %s1300 = scalar_lea.vmem [#allocation1], 5
          %1301 = vst [vmem:[%s1300] ss:$9 sm:$0xff] %v1276
          %s1302 = scalar_lea.vmem [#allocation1], 6
          %1303 = vst [vmem:[%s1302] ss:$9 sm:$0xff] %v1277
          %s1304 = scalar_lea.vmem [#allocation1], 7
          %1305 = vst [vmem:[%s1304] ss:$9 sm:$0xff] %v1278
          %v1306 = vld [vmem:[#allocation1] sm:$0xff]
          %1307 = vst [vmem:[#allocation1] ss:$9 sm:$0xff] %v1279
          %1308 = vst [vmem:[%s1292] ss:$9 sm:$0xff] %v1280
          %v1309 = vld [vmem:[#allocation1] sm:$0xff]
          %vm1312 = vcmask 261120
          %1313 = vst.msk [vmem:[#allocation2] sm:$0xff] %vm1312, %v1306
          %vm1314 = vcmask 254976
          %1315 = vst.msk [vmem:[#allocation2 + $0x8] sm:$0x3] %vm1314, %v1309
        $region104: #{tpu_custom_call.1} parent=99 // pred_fallthru
          _
        %v1316 = vld [vmem:[#allocation2] sm:$0xff]
        %v1317 = vld [vmem:[#allocation2 + $0x8] sm:$0x3]
        %v1318 = vld [vmem:[%s788] sm:$0x1]
        %v1319 = vld [vmem:[%s791] sm:$0x1]
        %v1320 = vld [vmem:[%s796] sm:$0xf]
        %v1321 = vld [vmem:[%s796 + $0x4] sm:$0xf]
        %v1322 = vld [vmem:[%s796 + $0x8] sm:$0xf]
        %v1323 = vld [vmem:[%s796 + $0xc] sm:$0xf]
        %v1324 = vld [vmem:[%s799] sm:$0x1]
        %v1325 = vld [vmem:[%s804] sm:$0xf]
        %v1326 = vld [vmem:[%s804 + $0x4] sm:$0xf]
        %v1327 = vld [vmem:[%s804 + $0x8] sm:$0xf]
        %v1328 = vld [vmem:[%s804 + $0xc] sm:$0xf]
        %v1329 = vld [vmem:[%s807] sm:$0x1]
        %v1330 = vld [vmem:[%s810] sm:$0x1]
        %v1331 = vld [vmem:[%s813] sm:$0x1]
        %v1332 = vld [vmem:[%s818] sm:$0xf]
        %v1333 = vld [vmem:[%s818 + $0x4] sm:$0xf]
        %v1334 = vld [vmem:[%s818 + $0x8] sm:$0xf]
        %v1335 = vld [vmem:[%s818 + $0xc] sm:$0xf]
        %v1336 = vld [vmem:[%s821] sm:$0x1]
        %v1337 = vld [vmem:[%s826] sm:$0xf]
        %v1338 = vld [vmem:[%s826 + $0x4] sm:$0xf]
        %v1339 = vld [vmem:[%s826 + $0x8] sm:$0xf]
        %v1340 = vld [vmem:[%s826 + $0xc] sm:$0xf]
        %v1341 = vld [vmem:[%s826 + $0x10] sm:$0xf]
        %v1342 = vld [vmem:[%s826 + $0x14] sm:$0xf]
        %v1343 = vld [vmem:[%s826 + $0x18] sm:$0xf]
        %v1344 = vld [vmem:[%s826 + $0x1c] sm:$0xf]
        %v1345 = vld [vmem:[%s826 + $0x20] sm:$0xf]
        %v1346 = vld [vmem:[%s826 + $0x24] sm:$0xf]
        %v1347 = vld [vmem:[%s826 + $0x28] sm:$0xf]
        %v1348 = vld [vmem:[%s826 + $0x2c] sm:$0xf]
        %v1349 = vld [vmem:[%s826 + $0x30] sm:$0xf]
        %v1350 = vld [vmem:[%s826 + $0x34] sm:$0xf]
        %v1351 = vld [vmem:[%s826 + $0x38] sm:$0xf]
        %v1352 = vld [vmem:[%s826 + $0x3c] sm:$0xf]
        %v1353 = vld [vmem:[%s829] sm:$0x1]
        %vm1354 = vcmask 261120
        %v1355 = vsel %vm1354, %v1316, 0.0
        %1356 = vadd.xlane.f32.xlu0 %v1355
        %v1357 = vpop.xlane.xlu0 %1356
        %vm1358 = vcmask 254976
        %v1359 = vsel %vm1358, %v1317, 0.0
        %1360 = vadd.xlane.f32.xlu0 %v1359
        %v1361 = vpop.xlane.xlu0 %1360
        %v1362 = vrcp.pop 32.0
        %v1363 = vmul.f32 32.0, %v1362
        %v1364 = vsub.f32 1.0, %v1363
        %v1365 = vmul.f32 %v1362, %v1364
        %v1366 = vadd.f32 %v1362, %v1365
        %vm1367 = vweird.f32 %v1362
        %v1368 = vsel %vm1367, %v1362, %v1366
        %v1369 = vmul.f32 %v1357, %v1368
        %v1370 = vmul.f32 %v1361, %v1368
        %v1371 = vsub.f32 %v1316, %v1369
        %v1372 = vsub.f32 %v1317, %v1370
        %v1373 = vmul.f32 %v1371, %v1371
        %v1374 = vmul.f32 %v1372, %v1372
        %v1375 = vsel %vm1354, %v1373, 0.0
        %1376 = vadd.xlane.f32.xlu0 %v1375
        %v1377 = vpop.xlane.xlu0 %1376
        %v1378 = vsel %vm1358, %v1374, 0.0
        %1379 = vadd.xlane.f32.xlu0 %v1378
        %v1380 = vpop.xlane.xlu0 %1379
        %v1381 = vmul.f32 %v1377, %v1368
        %v1382 = vmul.f32 %v1380, %v1368
        %v1383 = vadd.f32 %v1381, 1e-05
        %v1384 = vadd.f32 %v1382, 1e-05
        %v1385 = vrsqrt.pop %v1383
        %v1386 = vmul.f32 %v1385, %v1383
        %v1387 = vmul.f32 %v1386, %v1385
        %v1388 = vmul.f32 0.5, %v1387
        %v1389 = vsub.f32 1.5, %v1388
        %v1390 = vmul.f32 %v1385, %v1389
        %vm1391 = vweird.f32 %v1383
        %vm1392 = vweird.f32 %v1385
        %vm1393 = vmor %vm1391, %vm1392
        %v1394 = vsel %vm1393, %v1385, %v1390
        %v1395 = vrsqrt.pop %v1384
        %v1396 = vmul.f32 %v1395, %v1384
        %v1397 = vmul.f32 %v1396, %v1395
        %v1398 = vmul.f32 0.5, %v1397
        %v1399 = vsub.f32 1.5, %v1398
        %v1400 = vmul.f32 %v1395, %v1399
        %vm1401 = vweird.f32 %v1384
        %vm1402 = vweird.f32 %v1395
        %vm1403 = vmor %vm1401, %vm1402
        %v1404 = vsel %vm1403, %v1395, %v1400
        %v1405 = vmul.f32 %v1371, %v1394
        %v1406 = vmul.f32 %v1372, %v1404
        %v1408 = vperm.slane %v1318, 0
        %v1410 = vmul.f32 %v1405, %v1408
        %v1411 = vmul.f32 %v1406, %v1408
        %v1413 = vperm.slane %v1319, 0
        %v1415 = vadd.f32 %v1410, %v1413
        %v1416 = vadd.f32 %v1411, %v1413
        %v1417 = vpack.c.bf16 %v1416, %v1415
        %v1419 = vperm.slane %v1324, 0
        %v1425 = vunpack.c.l.b16 %v1320
        %v1426 = vunpack.c.l.b16 %v1321
        %v1427 = vunpack.c.l.b16 %v1322
        %v1428 = vunpack.c.l.b16 %v1323
        %v1429 = vpack.c.b16 %v1426, %v1425
        %v1430 = vpack.c.b16 %v1428, %v1427
        %v1434 = vsel %vm1354, %v1417, 0
        %1436 = vmatpush.bf16.msra.mxu0 0
        %1437 = vmatpush.bf16.msra.mxu0 0
        %1438 = vmatpush.bf16.msra.mxu0 0
        %1439 = vmatpush.bf16.msra.mxu0 0
        %1440 = vmatpush.bf16.msra.mxu0 0
        %1441 = vmatpush.bf16.msra.mxu0 0
        %1442 = vmatpush.bf16.msra.mxu0 %v1430
        %1443 = vmatpush.bf16.msra.mxu0 %v1429
        %1444 = vmatmul.bf16.gmra.mxu0 %v1434
        %v1445 = vpop.f32.mrf.mxu0
        %v1446 = vadd.f32 %v1419, %v1445
        %v1447 = vpop.f32.mrf.mxu0
        %v1448 = vadd.f32 %v1419, %v1447
        %1449 = vdwg.mxu0
        %v1452 = vrot.slane %v1446, 1
        %v1453 = vrot.slane %v1446, 2
        %v1454 = vrot.slane %v1446, 3
        %v1455 = vrot.slane %v1446, 4
        %v1456 = vrot.slane %v1446, 5
        %v1457 = vrot.slane %v1446, 6
        %v1458 = vrot.slane %v1446, 7
        %v1459 = vrot.slane %v1448, 1
        %1460 = vst [vmem:[#allocation1] ss:$9 sm:$0xff] %v1446
        %s1461 = scalar_lea.vmem [#allocation1], 1
        %1462 = vst [vmem:[%s1461] ss:$9 sm:$0xff] %v1452
        %s1463 = scalar_lea.vmem [#allocation1], 2
        %1464 = vst [vmem:[%s1463] ss:$9 sm:$0xff] %v1453
        %s1465 = scalar_lea.vmem [#allocation1], 3
        %1466 = vst [vmem:[%s1465] ss:$9 sm:$0xff] %v1454
        %s1467 = scalar_lea.vmem [#allocation1], 4
        %1468 = vst [vmem:[%s1467] ss:$9 sm:$0xff] %v1455
        %v1469 = vld [vmem:[#allocation1] sm:$0xff]
        %1470 = vst [vmem:[#allocation1] ss:$9 sm:$0xff] %v1456
        %1471 = vst [vmem:[%s1461] ss:$9 sm:$0xff] %v1457
        %1472 = vst [vmem:[%s1463] ss:$9 sm:$0xff] %v1458
        %1473 = vst [vmem:[%s1465] ss:$9 sm:$0xff] %v1448
        %1474 = vst [vmem:[%s1467] ss:$9 sm:$0xff] %v1459
        %v1475 = vld [vmem:[#allocation1] sm:$0xff]
        %v1478 = vpack.c.bf16 %v1469, %v1469
        %v1479 = vpack.c.bf16 %v1475, %v1475
        %1480 = vst [vmem:[#allocation1] ss:$9 sm:$0xff] %v1446
        %s1481 = scalar_lea.vmem [#allocation1], 1
        %1482 = vst [vmem:[%s1481] ss:$9 sm:$0xff] %v1452
        %s1483 = scalar_lea.vmem [#allocation1], 2
        %1484 = vst [vmem:[%s1483] ss:$9 sm:$0xff] %v1453
        %s1485 = scalar_lea.vmem [#allocation1], 3
        %1486 = vst [vmem:[%s1485] ss:$9 sm:$0xff] %v1454
        %s1487 = scalar_lea.vmem [#allocation1], 4
        %1488 = vst [vmem:[%s1487] ss:$9 sm:$0xff] %v1455
        %v1489 = vld [vmem:[#allocation1] sm:$0xff]
        %1490 = vst [vmem:[#allocation1] ss:$9 sm:$0xff] %v1456
        %1491 = vst [vmem:[%s1481] ss:$9 sm:$0xff] %v1457
        %1492 = vst [vmem:[%s1483] ss:$9 sm:$0xff] %v1458
        %1493 = vst [vmem:[%s1485] ss:$9 sm:$0xff] %v1448
        %1494 = vst [vmem:[%s1487] ss:$9 sm:$0xff] %v1459
        %v1495 = vld [vmem:[#allocation1] sm:$0xff]
        %v1498 = vpack.c.bf16 %v1489, %v1489
        %v1499 = vpack.c.bf16 %v1495, %v1495
        %1500 = vst [vmem:[#allocation1] ss:$9 sm:$0xff] %v1446
        %s1501 = scalar_lea.vmem [#allocation1], 1
        %1502 = vst [vmem:[%s1501] ss:$9 sm:$0xff] %v1452
        %s1503 = scalar_lea.vmem [#allocation1], 2
        %1504 = vst [vmem:[%s1503] ss:$9 sm:$0xff] %v1453
        %s1505 = scalar_lea.vmem [#allocation1], 3
        %1506 = vst [vmem:[%s1505] ss:$9 sm:$0xff] %v1454
        %s1507 = scalar_lea.vmem [#allocation1], 4
        %1508 = vst [vmem:[%s1507] ss:$9 sm:$0xff] %v1455
        %v1509 = vld [vmem:[#allocation1] sm:$0xff]
        %1510 = vst [vmem:[#allocation1] ss:$9 sm:$0xff] %v1456
        %1511 = vst [vmem:[%s1501] ss:$9 sm:$0xff] %v1457
        %1512 = vst [vmem:[%s1503] ss:$9 sm:$0xff] %v1458
        %1513 = vst [vmem:[%s1505] ss:$9 sm:$0xff] %v1448
        %1514 = vst [vmem:[%s1507] ss:$9 sm:$0xff] %v1459
        %v1515 = vld [vmem:[#allocation1] sm:$0xff]
        %v1518 = vpack.c.bf16 %v1509, %v1509
        %v1519 = vpack.c.bf16 %v1515, %v1515
        %v1521 = vunpack.c.l.b16 %v1498
        %v1522 = vpack.c.b16 %v1521, %v1521
        %1523 = vrot.lane.b32.xlu0 %v1522, 96
        %v1524 = vpop.permute.xlu0 %1523
        %vm1525 = vcmask 130048
        %v1527 = vsel %vm1525, %v1478, 0
        %v1530 = vsel %vm1525, %v1524, 0
        %1532 = vmatpush.bf16.xpose.msra.mxu0 0
        %1533 = vmatpush.bf16.xpose.msra.mxu0 0
        %1534 = vmatpush.bf16.xpose.msra.mxu0 0
        %1535 = vmatpush.bf16.xpose.msra.mxu0 0
        %1536 = vmatpush.bf16.xpose.msra.mxu0 0
        %1537 = vmatpush.bf16.xpose.msra.mxu0 0
        %1538 = vmatpush.bf16.xpose.msra.mxu0 0
        %1539 = vmatpush.bf16.xpose.msra.mxu0 %v1530
        %1540 = vmatmul.bf16.gmra.mxu0 %v1527
        %v1541 = vpop.f32.mrf.mxu0
        %v1542 = vadd.f32 0.0, %v1541
        %v1543 = vpop.f32.mrf.mxu0
        %1544 = vdwg.mxu0
        %v1546 = vunpack.c.l.b16 %v1499
        %v1547 = vpack.c.b16 %v1546, %v1546
        %1548 = vrot.lane.b32.xlu0 %v1547, 96
        %v1549 = vpop.permute.xlu0 %1548
        %v1551 = vsel %vm1525, %v1479, 0
        %v1554 = vsel %vm1525, %v1549, 0
        %1556 = vmatpush.bf16.xpose.msra.mxu0 0
        %1557 = vmatpush.bf16.xpose.msra.mxu0 0
        %1558 = vmatpush.bf16.xpose.msra.mxu0 0
        %1559 = vmatpush.bf16.xpose.msra.mxu0 0
        %1560 = vmatpush.bf16.xpose.msra.mxu0 0
        %1561 = vmatpush.bf16.xpose.msra.mxu0 0
        %1562 = vmatpush.bf16.xpose.msra.mxu0 0
        %1563 = vmatpush.bf16.xpose.msra.mxu0 %v1554
        %1564 = vmatmul.bf16.gmra.mxu0 %v1551
        %v1565 = vpop.f32.mrf.mxu0
        %v1566 = vadd.f32 0.0, %v1565
        %v1567 = vpop.f32.mrf.mxu0
        %1568 = vdwg.mxu0
        %v1569 = vmul.f32 %v1542, 0.25
        %v1570 = vmul.f32 %v1566, 0.25
        %vm1571 = vcmask 36864
        %v1572 = vsel %vm1571, %v1569, -inf
        %1573 = vmax.xlane.f32.xlu0 %v1572
        %v1574 = vpop.xlane.xlu0 %1573
        %v1575 = vsel %vm1571, %v1570, -inf
        %1576 = vmax.xlane.f32.xlu0 %v1575
        %v1577 = vpop.xlane.xlu0 %1576
        %v1578 = vsub.f32 %v1569, %v1574
        %v1579 = vsub.f32 %v1570, %v1577
        %v1580 = vmul.f32 %v1578, 1.442695
        %v1581 = vpow.pop %v1580
        %v1582 = vmul.f32 %v1579, 1.442695
        %v1583 = vpow.pop %v1582
        %v1584 = vsel %vm1571, %v1581, 0.0
        %1585 = vadd.xlane.f32.xlu0 %v1584
        %v1586 = vpop.xlane.xlu0 %1585
        %v1587 = vsel %vm1571, %v1583, 0.0
        %1588 = vadd.xlane.f32.xlu0 %v1587
        %v1589 = vpop.xlane.xlu0 %1588
        %v1590 = vrcp.pop %v1586
        %v1591 = vrcp.pop %v1589
        %v1592 = vmul.f32 %v1581, %v1590
        %v1593 = vmul.f32 %v1583, %v1591
        %v1594 = vpack.c.bf16 %v1592, %v1592
        %v1595 = vpack.c.bf16 %v1593, %v1593
        %v1597 = vunpack.c.l.b16 %v1518
        %v1598 = vpack.c.b16 %v1597, %v1597
        %1599 = vrot.lane.b32.xlu0 %v1598, 64
        %v1600 = vpop.permute.xlu0 %1599
        %vm1601 = vcmask 39936
        %v1603 = vsel %vm1601, %v1594, 0
        %vm1605 = vcmask 1041408
        %vm1606 = vcmask 1042432
        %v1607 = vsel %vm1605, 4294967295, 65535
        %v1608 = vsel %vm1606, %v1607, 0
        %v1610 = vand.u32 %v1600, %v1608
        %1612 = vmatpush.bf16.msra.mxu0 0
        %1613 = vmatpush.bf16.msra.mxu0 0
        %1614 = vmatpush.bf16.msra.mxu0 0
        %1615 = vmatpush.bf16.msra.mxu0 0
        %1616 = vmatpush.bf16.msra.mxu0 0
        %1617 = vmatpush.bf16.msra.mxu0 0
        %1618 = vmatpush.bf16.msra.mxu0 0
        %1619 = vmatpush.bf16.msra.mxu0 %v1610
        %1620 = vmatmul.bf16.gmra.mxu0 %v1603
        %v1621 = vpop.f32.mrf.mxu0
        %v1622 = vadd.f32 0.0, %v1621
        %v1623 = vpop.f32.mrf.mxu0
        %1624 = vdwg.mxu0
        %v1626 = vunpack.c.l.b16 %v1519
        %v1627 = vpack.c.b16 %v1626, %v1626
        %1628 = vrot.lane.b32.xlu0 %v1627, 64
        %v1629 = vpop.permute.xlu0 %1628
        %v1631 = vsel %vm1601, %v1595, 0
        %v1634 = vand.u32 %v1629, %v1608
        %1636 = vmatpush.bf16.msra.mxu0 0
        %1637 = vmatpush.bf16.msra.mxu0 0
        %1638 = vmatpush.bf16.msra.mxu0 0
        %1639 = vmatpush.bf16.msra.mxu0 0
        %1640 = vmatpush.bf16.msra.mxu0 0
        %1641 = vmatpush.bf16.msra.mxu0 0
        %1642 = vmatpush.bf16.msra.mxu0 0
        %1643 = vmatpush.bf16.msra.mxu0 %v1634
        %1644 = vmatmul.bf16.gmra.mxu0 %v1631
        %v1645 = vpop.f32.mrf.mxu0
        %v1646 = vadd.f32 0.0, %v1645
        %v1647 = vpop.f32.mrf.mxu0
        %1648 = vdwg.mxu0
        %1649 = vst [vmem:[#allocation1] ss:$9 sm:$0xff] %v1446
        %s1650 = scalar_lea.vmem [#allocation1], 1
        %1651 = vst [vmem:[%s1650] ss:$9 sm:$0xff] %v1452
        %s1652 = scalar_lea.vmem [#allocation1], 2
        %1653 = vst [vmem:[%s1652] ss:$9 sm:$0xff] %v1453
        %s1654 = scalar_lea.vmem [#allocation1], 3
        %1655 = vst [vmem:[%s1654] ss:$9 sm:$0xff] %v1454
        %s1656 = scalar_lea.vmem [#allocation1], 4
        %1657 = vst [vmem:[%s1656] ss:$9 sm:$0xff] %v1455
        %v1658 = vld [vmem:[#allocation1] sm:$0xff]
        %1659 = vst [vmem:[#allocation1] ss:$9 sm:$0xff] %v1456
        %1660 = vst [vmem:[%s1650] ss:$9 sm:$0xff] %v1457
        %1661 = vst [vmem:[%s1652] ss:$9 sm:$0xff] %v1458
        %1662 = vst [vmem:[%s1654] ss:$9 sm:$0xff] %v1448
        %1663 = vst [vmem:[%s1656] ss:$9 sm:$0xff] %v1459
        %v1664 = vld [vmem:[#allocation1] sm:$0xff]
        %v1667 = vpack.c.bf16 %v1658, %v1658
        %v1668 = vpack.c.bf16 %v1664, %v1664
        %1669 = vst [vmem:[#allocation1] ss:$9 sm:$0xff] %v1446
        %s1670 = scalar_lea.vmem [#allocation1], 1
        %1671 = vst [vmem:[%s1670] ss:$9 sm:$0xff] %v1452
        %s1672 = scalar_lea.vmem [#allocation1], 2
        %1673 = vst [vmem:[%s1672] ss:$9 sm:$0xff] %v1453
        %s1674 = scalar_lea.vmem [#allocation1], 3
        %1675 = vst [vmem:[%s1674] ss:$9 sm:$0xff] %v1454
        %s1676 = scalar_lea.vmem [#allocation1], 4
        %1677 = vst [vmem:[%s1676] ss:$9 sm:$0xff] %v1455
        %v1678 = vld [vmem:[#allocation1] sm:$0xff]
        %1679 = vst [vmem:[#allocation1] ss:$9 sm:$0xff] %v1456
        %1680 = vst [vmem:[%s1670] ss:$9 sm:$0xff] %v1457
        %1681 = vst [vmem:[%s1672] ss:$9 sm:$0xff] %v1458
        %1682 = vst [vmem:[%s1674] ss:$9 sm:$0xff] %v1448
        %1683 = vst [vmem:[%s1676] ss:$9 sm:$0xff] %v1459
        %v1684 = vld [vmem:[#allocation1] sm:$0xff]
        %v1687 = vpack.c.bf16 %v1678, %v1678
        %v1688 = vpack.c.bf16 %v1684, %v1684
        %1689 = vst [vmem:[#allocation1] ss:$9 sm:$0xff] %v1446
        %s1690 = scalar_lea.vmem [#allocation1], 1
        %1691 = vst [vmem:[%s1690] ss:$9 sm:$0xff] %v1452
        %s1692 = scalar_lea.vmem [#allocation1], 2
        %1693 = vst [vmem:[%s1692] ss:$9 sm:$0xff] %v1453
        %s1694 = scalar_lea.vmem [#allocation1], 3
        %1695 = vst [vmem:[%s1694] ss:$9 sm:$0xff] %v1454
        %s1696 = scalar_lea.vmem [#allocation1], 4
        %1697 = vst [vmem:[%s1696] ss:$9 sm:$0xff] %v1455
        %v1698 = vld [vmem:[#allocation1] sm:$0xff]
        %1699 = vst [vmem:[#allocation1] ss:$9 sm:$0xff] %v1456
        %1700 = vst [vmem:[%s1690] ss:$9 sm:$0xff] %v1457
        %1701 = vst [vmem:[%s1692] ss:$9 sm:$0xff] %v1458
        %1702 = vst [vmem:[%s1694] ss:$9 sm:$0xff] %v1448
        %1703 = vst [vmem:[%s1696] ss:$9 sm:$0xff] %v1459
        %v1704 = vld [vmem:[#allocation1] sm:$0xff]
        %v1707 = vpack.c.bf16 %v1698, %v1698
        %v1708 = vpack.c.bf16 %v1704, %v1704
        %v1710 = vunpack.c.l.b16 %v1667
        %v1711 = vpack.c.b16 %v1710, %v1710
        %1712 = vrot.lane.b32.xlu0 %v1711, 112
        %v1713 = vpop.permute.xlu0 %1712
        %v1715 = vunpack.c.l.b16 %v1687
        %v1716 = vpack.c.b16 %v1715, %v1715
        %1717 = vrot.lane.b32.xlu0 %v1716, 80
        %v1718 = vpop.permute.xlu0 %1717
        %v1720 = vsel %vm1525, %v1713, 0
        %v1723 = vsel %vm1525, %v1718, 0
        %1725 = vmatpush.bf16.xpose.msra.mxu0 0
        %1726 = vmatpush.bf16.xpose.msra.mxu0 0
        %1727 = vmatpush.bf16.xpose.msra.mxu0 0
        %1728 = vmatpush.bf16.xpose.msra.mxu0 0
        %1729 = vmatpush.bf16.xpose.msra.mxu0 0
        %1730 = vmatpush.bf16.xpose.msra.mxu0 0
        %1731 = vmatpush.bf16.xpose.msra.mxu0 0
        %1732 = vmatpush.bf16.xpose.msra.mxu0 %v1723
        %1733 = vmatmul.bf16.gmra.mxu0 %v1720
        %v1734 = vpop.f32.mrf.mxu0
        %v1735 = vadd.f32 0.0, %v1734
        %v1736 = vpop.f32.mrf.mxu0
        %1737 = vdwg.mxu0
        %v1739 = vunpack.c.l.b16 %v1668
        %v1740 = vpack.c.b16 %v1739, %v1739
        %1741 = vrot.lane.b32.xlu0 %v1740, 112
        %v1742 = vpop.permute.xlu0 %1741
        %v1744 = vunpack.c.l.b16 %v1688
        %v1745 = vpack.c.b16 %v1744, %v1744
        %1746 = vrot.lane.b32.xlu0 %v1745, 80
        %v1747 = vpop.permute.xlu0 %1746
        %v1749 = vsel %vm1525, %v1742, 0
        %v1752 = vsel %vm1525, %v1747, 0
        %1754 = vmatpush.bf16.xpose.msra.mxu0 0
        %1755 = vmatpush.bf16.xpose.msra.mxu0 0
        %1756 = vmatpush.bf16.xpose.msra.mxu0 0
        %1757 = vmatpush.bf16.xpose.msra.mxu0 0
        %1758 = vmatpush.bf16.xpose.msra.mxu0 0
        %1759 = vmatpush.bf16.xpose.msra.mxu0 0
        %1760 = vmatpush.bf16.xpose.msra.mxu0 0
        %1761 = vmatpush.bf16.xpose.msra.mxu0 %v1752
        %1762 = vmatmul.bf16.gmra.mxu0 %v1749
        %v1763 = vpop.f32.mrf.mxu0
        %v1764 = vadd.f32 0.0, %v1763
        %v1765 = vpop.f32.mrf.mxu0
        %1766 = vdwg.mxu0
        %v1767 = vmul.f32 %v1735, 0.25
        %v1768 = vmul.f32 %v1764, 0.25
        %v1769 = vsel %vm1571, %v1767, -inf
        %1770 = vmax.xlane.f32.xlu0 %v1769
        %v1771 = vpop.xlane.xlu0 %1770
        %v1772 = vsel %vm1571, %v1768, -inf
        %1773 = vmax.xlane.f32.xlu0 %v1772
        %v1774 = vpop.xlane.xlu0 %1773
        %v1775 = vsub.f32 %v1767, %v1771
        %v1776 = vsub.f32 %v1768, %v1774
        %v1777 = vmul.f32 %v1775, 1.442695
        %v1778 = vpow.pop %v1777
        %v1779 = vmul.f32 %v1776, 1.442695
        %v1780 = vpow.pop %v1779
        %v1781 = vsel %vm1571, %v1778, 0.0
        %1782 = vadd.xlane.f32.xlu0 %v1781
        %v1783 = vpop.xlane.xlu0 %1782
        %v1784 = vsel %vm1571, %v1780, 0.0
        %1785 = vadd.xlane.f32.xlu0 %v1784
        %v1786 = vpop.xlane.xlu0 %1785
        %v1787 = vrcp.pop %v1783
        %v1788 = vrcp.pop %v1786
        %v1789 = vmul.f32 %v1778, %v1787
        %v1790 = vmul.f32 %v1780, %v1788
        %v1791 = vpack.c.bf16 %v1789, %v1789
        %v1792 = vpack.c.bf16 %v1790, %v1790
        %v1794 = vunpack.c.l.b16 %v1707
        %v1795 = vpack.c.b16 %v1794, %v1794
        %1796 = vrot.lane.b32.xlu0 %v1795, 48
        %v1797 = vpop.permute.xlu0 %1796
        %v1799 = vsel %vm1601, %v1791, 0
        %v1802 = vand.u32 %v1797, %v1608
        %1804 = vmatpush.bf16.msra.mxu0 0
        %1805 = vmatpush.bf16.msra.mxu0 0
        %1806 = vmatpush.bf16.msra.mxu0 0
        %1807 = vmatpush.bf16.msra.mxu0 0
        %1808 = vmatpush.bf16.msra.mxu0 0
        %1809 = vmatpush.bf16.msra.mxu0 0
        %1810 = vmatpush.bf16.msra.mxu0 0
        %1811 = vmatpush.bf16.msra.mxu0 %v1802
        %1812 = vmatmul.bf16.gmra.mxu0 %v1799
        %v1813 = vpop.f32.mrf.mxu0
        %v1814 = vadd.f32 0.0, %v1813
        %v1815 = vpop.f32.mrf.mxu0
        %1816 = vdwg.mxu0
        %v1818 = vunpack.c.l.b16 %v1708
        %v1819 = vpack.c.b16 %v1818, %v1818
        %1820 = vrot.lane.b32.xlu0 %v1819, 48
        %v1821 = vpop.permute.xlu0 %1820
        %v1823 = vsel %vm1601, %v1792, 0
        %v1826 = vand.u32 %v1821, %v1608
        %1828 = vmatpush.bf16.msra.mxu0 0
        %1829 = vmatpush.bf16.msra.mxu0 0
        %1830 = vmatpush.bf16.msra.mxu0 0
        %1831 = vmatpush.bf16.msra.mxu0 0
        %1832 = vmatpush.bf16.msra.mxu0 0
        %1833 = vmatpush.bf16.msra.mxu0 0
        %1834 = vmatpush.bf16.msra.mxu0 0
        %1835 = vmatpush.bf16.msra.mxu0 %v1826
        %1836 = vmatmul.bf16.gmra.mxu0 %v1823
        %v1837 = vpop.f32.mrf.mxu0
        %v1838 = vadd.f32 0.0, %v1837
        %v1839 = vpop.f32.mrf.mxu0
        %1840 = vdwg.mxu0
        %1843 = vrot.lane.b32.xlu0 %v1814, 16
        %v1844 = vpop.permute.xlu0 %1843
        %1845 = vrot.lane.b32.xlu0 %v1838, 16
        %v1846 = vpop.permute.xlu0 %1845
        %v1849 = vsel %vm1525, %v1622, %v1844
        %v1850 = vsel %vm1525, %v1646, %v1846
        %v1853 = vrot.slane %v1849, 1
        %v1854 = vrot.slane %v1849, 2
        %v1855 = vrot.slane %v1849, 3
        %v1856 = vrot.slane %v1849, 4
        %v1857 = vrot.slane %v1850, 1
        %v1858 = vrot.slane %v1850, 2
        %v1859 = vrot.slane %v1850, 3
        %v1860 = vrot.slane %v1850, 4
        %1861 = vst [vmem:[#allocation1] ss:$9 sm:$0xff] %v1849
        %s1862 = scalar_lea.vmem [#allocation1], 1
        %1863 = vst [vmem:[%s1862] ss:$9 sm:$0xff] %v1853
        %s1864 = scalar_lea.vmem [#allocation1], 2
        %1865 = vst [vmem:[%s1864] ss:$9 sm:$0xff] %v1854
        %s1866 = scalar_lea.vmem [#allocation1], 3
        %1867 = vst [vmem:[%s1866] ss:$9 sm:$0xff] %v1855
        %s1868 = scalar_lea.vmem [#allocation1], 4
        %1869 = vst [vmem:[%s1868] ss:$9 sm:$0xff] %v1856
        %s1870 = scalar_lea.vmem [#allocation1], 5
        %1871 = vst [vmem:[%s1870] ss:$9 sm:$0xff] %v1850
        %s1872 = scalar_lea.vmem [#allocation1], 6
        %1873 = vst [vmem:[%s1872] ss:$9 sm:$0xff] %v1857
        %s1874 = scalar_lea.vmem [#allocation1], 7
        %1875 = vst [vmem:[%s1874] ss:$9 sm:$0xff] %v1858
        %v1876 = vld [vmem:[#allocation1] sm:$0xff]
        %1877 = vst [vmem:[#allocation1] ss:$9 sm:$0xff] %v1859
        %1878 = vst [vmem:[%s1862] ss:$9 sm:$0xff] %v1860
        %v1879 = vld [vmem:[#allocation1] sm:$0xff]
        %v1882 = vpack.c.bf16 %v1879, %v1876
        %v1887 = vunpack.c.l.b16 %v1325
        %v1888 = vunpack.c.l.b16 %v1326
        %v1889 = vunpack.c.l.b16 %v1327
        %v1890 = vunpack.c.l.b16 %v1328
        %v1891 = vpack.c.b16 %v1888, %v1887
        %v1892 = vpack.c.b16 %v1890, %v1889
        %v1896 = vsel %vm1354, %v1882, 0
        %1898 = vmatpush.bf16.msra.mxu0 0
        %1899 = vmatpush.bf16.msra.mxu0 0
        %1900 = vmatpush.bf16.msra.mxu0 0
        %1901 = vmatpush.bf16.msra.mxu0 0
        %1902 = vmatpush.bf16.msra.mxu0 0
        %1903 = vmatpush.bf16.msra.mxu0 0
        %1904 = vmatpush.bf16.msra.mxu0 %v1892
        %1905 = vmatpush.bf16.msra.mxu0 %v1891
        %1906 = vmatmul.bf16.gmra.mxu0 %v1896
        %v1907 = vpop.f32.mrf.mxu0
        %v1908 = vadd.f32 0.0, %v1907
        %v1909 = vpop.f32.mrf.mxu0
        %v1910 = vadd.f32 0.0, %v1909
        %1911 = vdwg.mxu0
        %v1912 = vadd.f32 %v1316, %v1908
        %v1913 = vadd.f32 %v1317, %v1910
        %v1915 = vperm.slane %v1329, 0
        %v1917 = vadd.f32 %v1912, %v1915
        %v1918 = vadd.f32 %v1913, %v1915
        %v1919 = vsel %vm1354, %v1917, 0.0
        %1920 = vadd.xlane.f32.xlu0 %v1919
        %v1921 = vpop.xlane.xlu0 %1920
        %v1922 = vsel %vm1358, %v1918, 0.0
        %1923 = vadd.xlane.f32.xlu0 %v1922
        %v1924 = vpop.xlane.xlu0 %1923
        %v1925 = vmul.f32 %v1921, %v1368
        %v1926 = vmul.f32 %v1924, %v1368
        %v1927 = vsub.f32 %v1917, %v1925
        %v1928 = vsub.f32 %v1918, %v1926
        %v1929 = vmul.f32 %v1927, %v1927
        %v1930 = vmul.f32 %v1928, %v1928
        %v1931 = vsel %vm1354, %v1929, 0.0
        %1932 = vadd.xlane.f32.xlu0 %v1931
        %v1933 = vpop.xlane.xlu0 %1932
        %v1934 = vsel %vm1358, %v1930, 0.0
        %1935 = vadd.xlane.f32.xlu0 %v1934
        %v1936 = vpop.xlane.xlu0 %1935
        %v1937 = vmul.f32 %v1933, %v1368
        %v1938 = vmul.f32 %v1936, %v1368
        %v1939 = vadd.f32 %v1937, 1e-05
        %v1940 = vadd.f32 %v1938, 1e-05
        %v1941 = vrsqrt.pop %v1939
        %v1942 = vmul.f32 %v1941, %v1939
        %v1943 = vmul.f32 %v1942, %v1941
        %v1944 = vmul.f32 0.5, %v1943
        %v1945 = vsub.f32 1.5, %v1944
        %v1946 = vmul.f32 %v1941, %v1945
        %vm1947 = vweird.f32 %v1939
        %vm1948 = vweird.f32 %v1941
        %vm1949 = vmor %vm1947, %vm1948
        %v1950 = vsel %vm1949, %v1941, %v1946
        %v1951 = vrsqrt.pop %v1940
        %v1952 = vmul.f32 %v1951, %v1940
        %v1953 = vmul.f32 %v1952, %v1951
        %v1954 = vmul.f32 0.5, %v1953
        %v1955 = vsub.f32 1.5, %v1954
        %v1956 = vmul.f32 %v1951, %v1955
        %vm1957 = vweird.f32 %v1940
        %vm1958 = vweird.f32 %v1951
        %vm1959 = vmor %vm1957, %vm1958
        %v1960 = vsel %vm1959, %v1951, %v1956
        %v1961 = vmul.f32 %v1927, %v1950
        %v1962 = vmul.f32 %v1928, %v1960
        %v1964 = vperm.slane %v1330, 0
        %v1966 = vmul.f32 %v1961, %v1964
        %v1967 = vmul.f32 %v1962, %v1964
        %v1969 = vperm.slane %v1331, 0
        %v1971 = vadd.f32 %v1966, %v1969
        %v1972 = vadd.f32 %v1967, %v1969
        %v1973 = vpack.c.bf16 %v1972, %v1971
        %v1975 = vperm.slane %v1336, 0
        %v1981 = vunpack.c.l.b16 %v1332
        %v1982 = vunpack.c.l.b16 %v1333
        %v1983 = vunpack.c.l.b16 %v1334
        %v1984 = vunpack.c.l.b16 %v1335
        %v1985 = vpack.c.b16 %v1982, %v1981
        %v1986 = vpack.c.b16 %v1984, %v1983
        %v1990 = vsel %vm1354, %v1973, 0
        %1992 = vmatpush.bf16.msra.mxu0 0
        %1993 = vmatpush.bf16.msra.mxu0 0
        %1994 = vmatpush.bf16.msra.mxu0 0
        %1995 = vmatpush.bf16.msra.mxu0 0
        %1996 = vmatpush.bf16.msra.mxu0 0
        %1997 = vmatpush.bf16.msra.mxu0 0
        %1998 = vmatpush.bf16.msra.mxu0 %v1986
        %1999 = vmatpush.bf16.msra.mxu0 %v1985
        %2000 = vmatmul.bf16.gmra.mxu0 %v1990
        %v2001 = vpop.f32.mrf.mxu0
        %v2002 = vadd.f32 %v1975, %v2001
        %v2003 = vpop.f32.mrf.mxu0
        %v2004 = vadd.f32 %v1975, %v2003
        %2005 = vdwg.mxu0
        %v2006 = vmul.f32 %v2002, 1.702
        %v2007 = vmul.f32 %v2004, 1.702
        %v2008 = vxor.u32 %v2006, 2147483648
        %v2009 = vxor.u32 %v2007, 2147483648
        %v2010 = vmul.f32 %v2008, 1.442695
        %v2011 = vpow.pop %v2010
        %v2012 = vmul.f32 %v2009, 1.442695
        %v2013 = vpow.pop %v2012
        %v2014 = vadd.f32 %v2011, 1.0
        %v2015 = vadd.f32 %v2013, 1.0
        %v2016 = vrcp.pop %v2014
        %v2017 = vmul.f32 %v2014, %v2016
        %v2018 = vsub.f32 1.0, %v2017
        %v2019 = vmul.f32 %v2016, %v2018
        %v2020 = vadd.f32 %v2016, %v2019
        %vm2021 = vweird.f32 %v2014
        %vm2022 = vweird.f32 %v2016
        %vm2023 = vmor %vm2021, %vm2022
        %v2024 = vsel %vm2023, %v2016, %v2020
        %v2025 = vand.u32 2147483647, %v2014
        %vm2026 = vcmp.eq.f32.partialorder %v2025, 8.507059e+37
        %v2027 = vand.u32 %v2014, 2147483648
        %v2028 = vor.u32 1.1754944e-38, %v2027
        %v2029 = vsel %vm2026, %v2028, %v2024
        %v2030 = vmul.f32 1.0, %v2029
        %v2031 = vrcp.pop %v2015
        %v2032 = vmul.f32 %v2015, %v2031
        %v2033 = vsub.f32 1.0, %v2032
        %v2034 = vmul.f32 %v2031, %v2033
        %v2035 = vadd.f32 %v2031, %v2034
        %vm2036 = vweird.f32 %v2015
        %vm2037 = vweird.f32 %v2031
        %vm2038 = vmor %vm2036, %vm2037
        %v2039 = vsel %vm2038, %v2031, %v2035
        %v2040 = vand.u32 2147483647, %v2015
        %vm2041 = vcmp.eq.f32.partialorder %v2040, 8.507059e+37
        %v2042 = vand.u32 %v2015, 2147483648
        %v2043 = vor.u32 1.1754944e-38, %v2042
        %v2044 = vsel %vm2041, %v2043, %v2039
        %v2045 = vmul.f32 1.0, %v2044
        %v2046 = vmul.f32 %v2002, %v2030
        %v2047 = vmul.f32 %v2004, %v2045
        %v2048 = vpack.c.bf16 %v2047, %v2046
        %v2065 = vunpack.c.l.b16 %v1337
        %v2066 = vunpack.c.l.b16 %v1338
        %v2067 = vunpack.c.l.b16 %v1339
        %v2068 = vunpack.c.l.b16 %v1340
        %v2069 = vunpack.c.l.b16 %v1341
        %v2070 = vunpack.c.l.b16 %v1342
        %v2071 = vunpack.c.l.b16 %v1343
        %v2072 = vunpack.c.l.b16 %v1344
        %v2073 = vunpack.c.l.b16 %v1345
        %v2074 = vunpack.c.l.b16 %v1346
        %v2075 = vunpack.c.l.b16 %v1347
        %v2076 = vunpack.c.l.b16 %v1348
        %v2077 = vunpack.c.l.b16 %v1349
        %v2078 = vunpack.c.l.b16 %v1350
        %v2079 = vunpack.c.l.b16 %v1351
        %v2080 = vunpack.c.l.b16 %v1352
        %v2081 = vpack.c.b16 %v2066, %v2065
        %v2082 = vpack.c.b16 %v2068, %v2067
        %v2083 = vpack.c.b16 %v2070, %v2069
        %v2084 = vpack.c.b16 %v2072, %v2071
        %v2085 = vpack.c.b16 %v2074, %v2073
        %v2086 = vpack.c.b16 %v2076, %v2075
        %v2087 = vpack.c.b16 %v2078, %v2077
        %v2088 = vpack.c.b16 %v2080, %v2079
        %2097 = vmatpush.bf16.msra.mxu0 %v2088
        %2098 = vmatpush.bf16.msra.mxu0 %v2087
        %2099 = vmatpush.bf16.msra.mxu0 %v2086
        %2100 = vmatpush.bf16.msra.mxu0 %v2085
        %2101 = vmatpush.bf16.msra.mxu0 %v2084
        %2102 = vmatpush.bf16.msra.mxu0 %v2083
        %2103 = vmatpush.bf16.msra.mxu0 %v2082
        %2104 = vmatpush.bf16.msra.mxu0 %v2081
        %2105 = vmatmul.bf16.gmra.mxu0 %v2048
        %v2106 = vpop.f32.mrf.mxu0
        %v2107 = vadd.f32 0.0, %v2106
        %v2108 = vpop.f32.mrf.mxu0
        %v2109 = vadd.f32 0.0, %v2108
        %2110 = vdwg.mxu0
        %v2111 = vadd.f32 %v1917, %v2107
        %v2112 = vadd.f32 %v1918, %v2109
        %v2114 = vperm.slane %v1353, 0
        %v2116 = vadd.f32 %v2111, %v2114
        %v2117 = vadd.f32 %v2112, %v2114
        %2118 = vst.msk [vmem:[#allocation2] sm:$0xff] %vm1354, %v2116
        %2119 = vst.msk [vmem:[#allocation2 + $0x8] sm:$0x3] %vm1358, %v2117
        %p2120 = scmp.eq.s32.totalorder %s37, 1
        // Predicated region
        $region105: #{tpu_custom_call.1} parent=99 // pred_check
          %p2121 = pneg %p2120
        $region106: #{tpu_custom_call.1} parent=99 // pred_check_branch
          %2123 = sbr.rel (%p2121) target = $region108
        $region107: #{tpu_custom_call.1} parent=99 // pred_region
          %v2125 = vrot.slane %v2116, 5
          %v2127 = vld [vmem:[%s17] sm:$0x1]
          %v2128 = vld [vmem:[%s18] sm:$0x1]
          %2129 = vst [vmem:[#allocation1] ss:$9 sm:$0xff] %v2116
          %s2130 = scalar_lea.vmem [#allocation1], 1
          %2131 = vst [vmem:[%s2130] ss:$9 sm:$0xff] %v2125
          %v2132 = vld [vmem:[#allocation1] sm:$0xff]
          %v2134 = vsel %vm1358, %v2132, 0.0
          %2135 = vadd.xlane.f32.xlu0 %v2134
          %v2136 = vpop.xlane.xlu0 %2135
          %v2137 = vmul.f32 %v2136, %v1368
          %v2139 = vperm.slane %v2137, 0
          %v2140 = vperm.slane %v2137, 1
          %v2143 = vsub.f32 %v2116, %v2139
          %v2144 = vsub.f32 %v2125, %v2140
          %v2145 = vmul.f32 %v2143, %v2143
          %v2146 = vmul.f32 %v2144, %v2144
          %2149 = vst [vmem:[#allocation1] ss:$9 sm:$0xff] %v2145
          %s2150 = scalar_lea.vmem [#allocation1], 1
          %2151 = vst [vmem:[%s2150] ss:$9 sm:$0xff] %v2146
          %v2152 = vld [vmem:[#allocation1] sm:$0xff]
          %v2154 = vsel %vm1358, %v2152, 0.0
          %2155 = vadd.xlane.f32.xlu0 %v2154
          %v2156 = vpop.xlane.xlu0 %2155
          %v2157 = vmul.f32 %v2156, %v1368
          %v2158 = vadd.f32 %v2157, 1e-05
          %v2159 = vrsqrt.pop %v2158
          %v2160 = vmul.f32 %v2159, %v2158
          %v2161 = vmul.f32 %v2160, %v2159
          %v2162 = vmul.f32 0.5, %v2161
          %v2163 = vsub.f32 1.5, %v2162
          %v2164 = vmul.f32 %v2159, %v2163
          %vm2165 = vweird.f32 %v2158
          %vm2166 = vweird.f32 %v2159
          %vm2167 = vmor %vm2165, %vm2166
          %v2168 = vsel %vm2167, %v2159, %v2164
          %v2170 = vperm.slane %v2168, 0
          %v2171 = vperm.slane %v2168, 1
          %v2174 = vmul.f32 %v2143, %v2170
          %v2175 = vmul.f32 %v2144, %v2171
          %v2177 = vperm.slane %v2127, 0
          %v2179 = vrot.slane %v2177, 1
          %v2181 = vmul.f32 %v2174, %v2177
          %v2182 = vmul.f32 %v2175, %v2179
          %v2184 = vperm.slane %v2128, 0
          %v2186 = vrot.slane %v2184, 1
          %v2188 = vadd.f32 %v2181, %v2184
          %v2189 = vadd.f32 %v2182, %v2186
          %v2190 = vld [vmem:[%s19] sm:$0xf]
          %v2191 = vld [vmem:[%s19 + $0x4] sm:$0xf]
          %v2192 = vld [vmem:[%s19 + $0x8] sm:$0xf]
          %v2193 = vld [vmem:[%s19 + $0xc] sm:$0xf]
          %v2194 = vpack.c.bf16 %v2188, %v2188
          %v2195 = vpack.c.bf16 %v2189, %v2189
          %v2198 = vunpack.c.l.b16 %v2194
          %v2199 = vunpack.c.l.b16 %v2195
          %v2200 = vrot.slane %v2199, 7
          %vm2201 = vcmask 1041409
          %v2202 = vsel %vm2201, %v2200, %v2198
          %v2203 = vpack.c.b16 %v2202, %v2202
          %v2208 = vunpack.c.l.b16 %v2190
          %v2209 = vunpack.c.l.b16 %v2191
          %v2210 = vunpack.c.l.b16 %v2192
          %v2211 = vunpack.c.l.b16 %v2193
          %v2212 = vpack.c.b16 %v2209, %v2208
          %v2213 = vpack.c.b16 %v2211, %v2210
          %v2217 = vsel %vm1354, %v2203, 0
          %2219 = vmatpush.bf16.msra.mxu0 0
          %2220 = vmatpush.bf16.msra.mxu0 0
          %2221 = vmatpush.bf16.msra.mxu0 0
          %2222 = vmatpush.bf16.msra.mxu0 0
          %2223 = vmatpush.bf16.msra.mxu0 0
          %2224 = vmatpush.bf16.msra.mxu0 0
          %2225 = vmatpush.bf16.msra.mxu0 %v2213
          %2226 = vmatpush.bf16.msra.mxu0 %v2212
          %2227 = vmatmul.bf16.gmra.mxu0 %v2217
          %v2228 = vpop.f32.mrf.mxu0
          %v2229 = vadd.f32 0.0, %v2228
          %v2230 = vpop.f32.mrf.mxu0
          %2231 = vdwg.mxu0
          %vm2232 = vcmask 123904
          %2233 = vst.msk [vmem:[#allocation3] sm:$0x3] %vm2232, %v2229
        $region108: #{tpu_custom_call.1} parent=99 // pred_fallthru
          _
        // Predicated region
        $region109: #{tpu_custom_call.1} parent=99 // pred_check
          %p2234 = pneg %p547
        $region110: #{tpu_custom_call.1} parent=99 // pred_check_branch
          %2236 = sbr.rel (%p2234) target = $region112
        $region111: #{tpu_custom_call.1} parent=99 // pred_region
          %2238 = vsyncadd [#allocation4], 0
          %s2239 = smul.addr %s36, 2
          %s2240 = scalar_lea.hbm %s20, %s2239
          %s2242 = sshll.u32 [#allocation3], 4
          %s2243 = int_to_ptr.vmem [resolvable:$true] %s2242
          %s2244 = sshll.u32 %s2240, 4
          %s2245 = int_to_ptr.hbm [resolvable:$true] %s2244
          %2247 = dma.vmem_to_hbm [thread:$0]  %s2243, 32, %s2245, [#allocation4]
        $region112: #{tpu_custom_call.1} parent=99 // pred_fallthru
          _
        // Predicated region
        $region113: #{tpu_custom_call.1} parent=99 // pred_check
          %p2248 = pneg %p547
        $region114: #{tpu_custom_call.1} parent=99 // pred_check_branch
          %2250 = sbr.rel (%p2248) target = $region116
        $region115: #{tpu_custom_call.1} parent=99 // pred_region
          %2252 = dma.done [#allocation4], 32
        $region116: #{tpu_custom_call.1} parent=99 // pred_fallthru
          _
      $region100: #{tpu_custom_call.1} parent=5 // pred_fallthru
        _
      %p2253 = scmp.le.s32.totalorder 2, %s27
      // Predicated region
      $region117: #{tpu_custom_call.1} parent=5 // pred_check
        %p2254 = pneg %p2253
      $region118: #{tpu_custom_call.1} parent=5 // pred_check_branch
        %2256 = sbr.rel (%p2254) target = $region120
      $region119: #{tpu_custom_call.1} parent=5 // pred_region
        %s2257 = ssub.s32 %s27, 2
      $region120: #{tpu_custom_call.1} parent=5 // pred_fallthru
        _
    $region6: #{tpu_custom_call.1} parent=1 // loop_footer
      %s31 = sadd.s32 1, %s27
    $region7: #{tpu_custom_call.1} parent=1 // loop_footer_branch
      %26 = sbr.rel target = $region3
    $region8: #{tpu_custom_call.1} parent=1 // loop_exit
      _
    %2258 = vsyncpa [#allocation4], 1
    %s2259 = scalar_lea.sflag [#allocation4], 1
    %2260 = vsyncpa %s2259, 1

</llo_original>
